<compile_context>
chip_gen: v5e
topology: v5e:2x2
jax: 0.10.0
libtpu: 0.0.40
codegen_flags: <defaults>
</compile_context>

<pallas_src>
import functools

import jax
import jax.numpy as jnp
import numpy as np
from jax.experimental import pallas as pl
from jax.experimental.pallas import tpu as pltpu


# ---------------------------------------------------------------------------
# Kernels
# ---------------------------------------------------------------------------

def _mha_weights_kernel(q_ref, k_ref, v_ref, wq_ref, wk_ref, wv_ref, wo_ref,
                        o_ref, w_ref, *, num_heads, attention_type,
                        compute_dtype, approx_recip):
    """Fused MHA for one (batch, q-tile) grid point; also writes attn weights."""
    cd = compute_dtype
    f32 = jnp.float32
    h = num_heads

    q = q_ref[0]            # [tq, q_dim]
    k = k_ref[0]            # [Sk, k_dim]
    v = v_ref[0]            # [Sk, v_dim]

    qb = jnp.broadcast_to(q.astype(cd)[None], (h,) + q.shape)
    kb = jnp.broadcast_to(k.astype(cd)[None], (h,) + k.shape)
    vb = jnp.broadcast_to(v.astype(cd)[None], (h,) + v.shape)

    # Per-head projections as batched MXU matmuls (head on leading axis).
    # wq already carries the 1/sqrt(dqk) logits scale (folded host-side).
    qp = jnp.einsum("hsq,hqd->hsd", qb, wq_ref[...].astype(cd),
                    preferred_element_type=f32)
    kp = jnp.einsum("hsk,hkd->hsd", kb, wk_ref[...].astype(cd),
                    preferred_element_type=f32)
    vp = jnp.einsum("hsv,hvd->hsd", vb, wv_ref[...].astype(cd),
                    preferred_element_type=f32)

    logits = jnp.einsum("hqd,hkd->hqk", qp.astype(cd), kp.astype(cd),
                        preferred_element_type=f32)          # [H, tq, Sk]

    if attention_type == "softmax":
        m = jnp.max(logits, axis=-1, keepdims=True)
        e = jnp.exp(logits - m)
        s = jnp.sum(e, axis=-1, keepdims=True)
        if approx_recip:
            w = e * pl.reciprocal(s, approx=True)
        else:
            w = e / s
    elif attention_type == "relu":
        w = jnp.maximum(logits, 0.0)
    else:  # 'linear'
        w = logits

    # TODO(synk): dropout with rate > 0 and the optional multiplicative mask are
    #             not implemented (module default: dropout=0.0 / eval, mask=None).
    w_ref[0] = w.astype(w_ref.dtype)

    ov = jnp.einsum("hqk,hkd->hqd", w.astype(cd), vp.astype(cd),
                    preferred_element_type=f32)               # [H, tq, dvo]
    oh = jnp.einsum("hqd,hdo->hqo", ov.astype(cd), wo_ref[...].astype(cd),
                    preferred_element_type=f32)               # [H, tq, o_dim]
    o_ref[0] = jnp.sum(oh, axis=0).astype(o_ref.dtype)


def _mha_flash_kernel(q_ref, k_ref, v_ref, wq_ref, wk_ref, wv_ref, wo_ref,
                      o_ref, qp_scr, acc_scr, m_scr, l_scr, *,
                      num_heads, attention_type, compute_dtype, approx_recip):
    """Flash-style MHA: grid (B, Sq/tq, Sk/tk); never materializes the weights."""
    cd = compute_dtype
    f32 = jnp.float32
    h = num_heads
    ki = pl.program_id(2)
    nk = pl.num_programs(2)

    @pl.when(ki == 0)
    def _init():
        q = q_ref[0]
        qb = jnp.broadcast_to(q.astype(cd)[None], (h,) + q.shape)
        qp_scr[...] = jnp.einsum("hsq,hqd->hsd", qb, wq_ref[...].astype(cd),
                                 preferred_element_type=f32)
        acc_scr[...] = jnp.zeros_like(acc_scr)
        if attention_type == "softmax":
            m_scr[...] = jnp.full_like(m_scr, -jnp.inf)
            l_scr[...] = jnp.zeros_like(l_scr)

    k = k_ref[0]            # [tk, k_dim]
    v = v_ref[0]            # [tk, v_dim]
    kb = jnp.broadcast_to(k.astype(cd)[None], (h,) + k.shape)
    vb = jnp.broadcast_to(v.astype(cd)[None], (h,) + v.shape)
    kp = jnp.einsum("hsk,hkd->hsd", kb, wk_ref[...].astype(cd),
                    preferred_element_type=f32)
    vp = jnp.einsum("hsv,hvd->hsd", vb, wv_ref[...].astype(cd),
                    preferred_element_type=f32)

    logits = jnp.einsum("hqd,hkd->hqk", qp_scr[...].astype(cd), kp.astype(cd),
                        preferred_element_type=f32)           # [H, tq, tk]

    if attention_type == "softmax":
        m_prev = m_scr[...]
        m_new = jnp.maximum(m_prev, jnp.max(logits, axis=-1, keepdims=True))
        alpha = jnp.exp(m_prev - m_new)
        p = jnp.exp(logits - m_new)
        l_scr[...] = alpha * l_scr[...] + jnp.sum(p, axis=-1, keepdims=True)
        acc_scr[...] = alpha * acc_scr[...] + jnp.einsum(
            "hqk,hkd->hqd", p.astype(cd), vp.astype(cd),
            preferred_element_type=f32)
        m_scr[...] = m_new
    else:
        w = jnp.maximum(logits, 0.0) if attention_type == "relu" else logits
        acc_scr[...] = acc_scr[...] + jnp.einsum(
            "hqk,hkd->hqd", w.astype(cd), vp.astype(cd),
            preferred_element_type=f32)

    @pl.when(ki == nk - 1)
    def _finalize():
        acc = acc_scr[...]
        if attention_type == "softmax":
            if approx_recip:
                acc = acc * pl.reciprocal(l_scr[...], approx=True)
            else:
                acc = acc / l_scr[...]
        oh = jnp.einsum("hqd,hdo->hqo", acc.astype(cd), wo_ref[...].astype(cd),
                        preferred_element_type=f32)
        o_ref[0] = jnp.sum(oh, axis=0).astype(o_ref.dtype)


# ---------------------------------------------------------------------------
# Wrapper
# ---------------------------------------------------------------------------

def _pick_tile(total, target):
    """Largest divisor of `total` that is <= target and a multiple of 8 (or full)."""
    if total <= target:
        return total
    for t in range(min(target, total), 0, -1):
        if total % t == 0 and t % 8 == 0:
            return t
    return total


def multi_head_attention(query, key, value, params, *,
                         num_heads, qk_embed_size_per_head, vo_embed_size_per_head,
                         attention_type="softmax", return_weights=True,
                         compute_dtype=jnp.float32, approx_recip=False,
                         weights_dtype=jnp.float32,
                         block_q=128, block_k=256, vmem_limit_bytes=None):
    """Pallas MHA forward with the PyTorch module's semantics (mask=None, no bias,
    dropout=0).  Returns (o, weights); weights is None when return_weights=False
    (flash-style kv-tiled path — the (B, H, Sq, Sk) tensor is never materialized)."""
    b, sq, q_dim = query.shape
    _, sk, k_dim = key.shape
    v_dim = value.shape[-1]
    h = num_heads
    dqk = qk_embed_size_per_head
    dvo = vo_embed_size_per_head
    wq, wk, wv, wo = params                 # packed [in, out] (= PyTorch weight.T)
    o_dim = wo.shape[1]

    # Head-major weight layouts: [H, in, d_head] / [H, dvo, o_dim] (host-side, tiny).
    # The 1/sqrt(dqk) logits scale is folded into the q-projection weights.
    wq_h = wq.reshape(q_dim, h, dqk).transpose(1, 0, 2) * (dqk ** -0.5)
    wk_h = wk.reshape(k_dim, h, dqk).transpose(1, 0, 2)
    wv_h = wv.reshape(v_dim, h, dvo).transpose(1, 0, 2)
    wo_h = wo.reshape(h, dvo, o_dim)

    tq = _pick_tile(sq, block_q)
    nq = sq // tq

    cp_kwargs = {}
    if vmem_limit_bytes is not None:
        cp_kwargs["vmem_limit_bytes"] = int(vmem_limit_bytes)

    if return_weights:
        kernel = functools.partial(
            _mha_weights_kernel, num_heads=h,
            attention_type=attention_type, compute_dtype=compute_dtype,
            approx_recip=approx_recip)
        grid_spec = pltpu.PrefetchScalarGridSpec(
            num_scalar_prefetch=0,
            grid=(b, nq),
            in_specs=[
                pl.BlockSpec((1, tq, q_dim), lambda bi, qi: (bi, qi, 0)),
                pl.BlockSpec((1, sk, k_dim), lambda bi, qi: (bi, 0, 0)),
                pl.BlockSpec((1, sk, v_dim), lambda bi, qi: (bi, 0, 0)),
                pl.BlockSpec(wq_h.shape, lambda bi, qi: (0, 0, 0)),
                pl.BlockSpec(wk_h.shape, lambda bi, qi: (0, 0, 0)),
                pl.BlockSpec(wv_h.shape, lambda bi, qi: (0, 0, 0)),
                pl.BlockSpec(wo_h.shape, lambda bi, qi: (0, 0, 0)),
            ],
            out_specs=(
                pl.BlockSpec((1, tq, o_dim), lambda bi, qi: (bi, qi, 0)),
                pl.BlockSpec((1, h, tq, sk), lambda bi, qi: (bi, 0, qi, 0)),
            ),
        )
        o, w = pl.pallas_call(
            kernel,
            grid_spec=grid_spec,
            out_shape=(
                jax.ShapeDtypeStruct((b, sq, o_dim), query.dtype),
                jax.ShapeDtypeStruct((b, h, sq, sk), weights_dtype),
            ),
            compiler_params=pltpu.CompilerParams(
                dimension_semantics=("parallel", "parallel"), **cp_kwargs),
        )(query, key, value, wq_h, wk_h, wv_h, wo_h)
        return o, w

    # --- flash-style path: no attention-weights materialization --------------
    tk = _pick_tile(sk, block_k)
    nk = sk // tk
    kernel = functools.partial(
        _mha_flash_kernel, num_heads=h,
        attention_type=attention_type, compute_dtype=compute_dtype,
        approx_recip=approx_recip)
    grid_spec = pltpu.PrefetchScalarGridSpec(
        num_scalar_prefetch=0,
        grid=(b, nq, nk),
        in_specs=[
            pl.BlockSpec((1, tq, q_dim), lambda bi, qi, ki: (bi, qi, 0)),
            pl.BlockSpec((1, tk, k_dim), lambda bi, qi, ki: (bi, ki, 0)),
            pl.BlockSpec((1, tk, v_dim), lambda bi, qi, ki: (bi, ki, 0)),
            pl.BlockSpec(wq_h.shape, lambda bi, qi, ki: (0, 0, 0)),
            pl.BlockSpec(wk_h.shape, lambda bi, qi, ki: (0, 0, 0)),
            pl.BlockSpec(wv_h.shape, lambda bi, qi, ki: (0, 0, 0)),
            pl.BlockSpec(wo_h.shape, lambda bi, qi, ki: (0, 0, 0)),
        ],
        out_specs=pl.BlockSpec((1, tq, o_dim), lambda bi, qi, ki: (bi, qi, 0)),
        scratch_shapes=[
            pltpu.VMEM((h, tq, dqk), jnp.float32),   # projected & pre-scaled q
            pltpu.VMEM((h, tq, dvo), jnp.float32),   # output accumulator
            pltpu.VMEM((h, tq, 1), jnp.float32),     # running max
            pltpu.VMEM((h, tq, 1), jnp.float32),     # running sum
        ],
    )
    o = pl.pallas_call(
        kernel,
        grid_spec=grid_spec,
        out_shape=jax.ShapeDtypeStruct((b, sq, o_dim), query.dtype),
        compiler_params=pltpu.CompilerParams(
            dimension_semantics=("parallel", "parallel", "arbitrary"), **cp_kwargs),
    )(query, key, value, wq_h, wk_h, wv_h, wo_h)
    return o, None


# ---------------------------------------------------------------------------
# Pure-JAX reference (mirrors the PyTorch forward)
# ---------------------------------------------------------------------------

def _reference(query, key, value, params, *, num_heads, dqk, dvo, attention_type):
    wq, wk, wv, wo = params
    b, sq, _ = query.shape
    _, sk, _ = key.shape
    q = (query @ wq).reshape(b, sq, num_heads, dqk)
    k = (key @ wk).reshape(b, sk, num_heads, dqk)
    v = (value @ wv).reshape(b, sk, num_heads, dvo)
    logits = jnp.einsum("bnhk,bmhk->bhnm", q, k) * dqk ** (-0.5)
    if attention_type == "softmax":
        w = jax.nn.softmax(logits, axis=-1)
    elif attention_type == "relu":
        w = jnp.maximum(logits, 0.0)
    else:
        w = logits
    o = jnp.einsum("bhnm,bmhk->bnhk", w, v).reshape(b, sq, num_heads * dvo)
    return o @ wo, w


# ---------------------------------------------------------------------------
# Tests
# ---------------------------------------------------------------------------

if __name__ == "__main__":
    def make_inputs(rng, b, sq, sk, q_dim, k_dim, v_dim, o_dim, h, dqk, dvo, wstd):
        kq, kk, kv, ko, k1, k2, k3 = jax.random.split(rng, 7)
        wq = wstd * jax.random.normal(kq, (q_dim, h * dqk), jnp.float32)
        wk = wstd * jax.random.normal(kk, (k_dim, h * dqk), jnp.float32)
        wv = wstd * jax.random.normal(kv, (v_dim, h * dvo), jnp.float32)
        wo = wstd * jax.random.normal(ko, (h * dvo, o_dim), jnp.float32)
        query = jax.random.normal(k1, (b, sq, q_dim), jnp.float32)
        key_t = jax.random.normal(k2, (b, sk, k_dim), jnp.float32)
        value = jax.random.normal(k3, (b, sk, v_dim), jnp.float32)
        return (wq, wk, wv, wo), query, key_t, value

    # --- Test 1: module-default small shapes, full-fidelity path (f32, weights) ---
    B, Sq, Sk, H, DQK, DVO = 2, 8, 8, 4, 8, 8     # q_dim=k_dim=dqk, v_dim=o_dim=dvo
    rng = jax.random.PRNGKey(0)
    params, q_s, k_s, v_s = make_inputs(rng, B, Sq, Sk, DQK, DQK, DVO, DVO,
                                        H, DQK, DVO, 0.02)
    for attn_type in ("softmax", "relu", "linear"):
        o, w = multi_head_attention(
            q_s, k_s, v_s, params, num_heads=H, qk_embed_size_per_head=DQK,
            vo_embed_size_per_head=DVO, attention_type=attn_type,
            return_weights=True)
        o = jax.block_until_ready(o)
        w = jax.block_until_ready(w)
        o_r, w_r = _reference(q_s, k_s, v_s, params, num_heads=H, dqk=DQK,
                              dvo=DVO, attention_type=attn_type)
        np.testing.assert_allclose(np.asarray(o), np.asarray(o_r),
                                   rtol=1e-4, atol=1e-5)
        np.testing.assert_allclose(np.asarray(w), np.asarray(w_r),
                                   rtol=1e-4, atol=1e-5)

    # Flash path (no weights output) at the same small shape, softmax.
    o, w_none = multi_head_attention(
        q_s, k_s, v_s, params, num_heads=H, qk_embed_size_per_head=DQK,
        vo_embed_size_per_head=DVO, attention_type="softmax",
        return_weights=False)
    o = jax.block_until_ready(o)
    assert w_none is None
    o_r, _ = _reference(q_s, k_s, v_s, params, num_heads=H, dqk=DQK, dvo=DVO,
                        attention_type="softmax")
    np.testing.assert_allclose(np.asarray(o), np.asarray(o_r), rtol=1e-4, atol=1e-5)

    # --- Test 2: larger, tiled (Sq=Sk=256, tq=tk=128), flash path, f32 ---
    B2, Sq2, Sk2, H2, DQK2, DVO2 = 2, 256, 256, 4, 16, 16
    QD2, KD2, VD2, OD2 = 32, 32, 32, 32
    params2, q_l, k_l, v_l = make_inputs(jax.random.PRNGKey(1), B2, Sq2, Sk2,
                                         QD2, KD2, VD2, OD2, H2, DQK2, DVO2, 0.1)
    o2, _ = multi_head_attention(
        q_l, k_l, v_l, params2, num_heads=H2, qk_embed_size_per_head=DQK2,
        vo_embed_size_per_head=DVO2, attention_type="softmax",
        return_weights=False, block_q=128, block_k=128,
        vmem_limit_bytes=48 * 1024 * 1024)
    o2 = jax.block_until_ready(o2)
    o2_r, w2_r = _reference(q_l, k_l, v_l, params2, num_heads=H2, dqk=DQK2,
                            dvo=DVO2, attention_type="softmax")
    np.testing.assert_allclose(np.asarray(o2), np.asarray(o2_r),
                               rtol=1e-2, atol=1e-2)

    # --- Test 3: bf16 matmul operands + approx-reciprocal softmax + bf16 weights ---
    o3, w3 = multi_head_attention(
        q_l, k_l, v_l, params2, num_heads=H2, qk_embed_size_per_head=DQK2,
        vo_embed_size_per_head=DVO2, attention_type="softmax",
        return_weights=True, compute_dtype=jnp.bfloat16, approx_recip=True,
        weights_dtype=jnp.bfloat16, block_q=128)
    o3 = jax.block_until_ready(o3)
    w3 = jax.block_until_ready(w3)
    np.testing.assert_allclose(np.asarray(o3), np.asarray(o2_r),
                               rtol=1e-1, atol=1e-1)
    np.testing.assert_allclose(np.asarray(w3.astype(jnp.float32)), np.asarray(w2_r),
                               rtol=1e-1, atol=1e-1)

    print("KERNEL_OK")
</pallas_src>

<mosaic_0001>
module attributes {stable_mosaic.version = 11 : i64} {
  func.func @_mha_weights_kernel(%arg0: i32, %arg1: i32, %arg2: memref<1x8x8xf32, #tpu.memory_space<vmem>>, %arg3: memref<1x8x8xf32, #tpu.memory_space<vmem>>, %arg4: memref<1x8x8xf32, #tpu.memory_space<vmem>>, %arg5: memref<4x8x8xf32, #tpu.memory_space<vmem>>, %arg6: memref<4x8x8xf32, #tpu.memory_space<vmem>>, %arg7: memref<4x8x8xf32, #tpu.memory_space<vmem>>, %arg8: memref<4x8x8xf32, #tpu.memory_space<vmem>>, %arg9: memref<1x8x8xf32, #tpu.memory_space<vmem>>, %arg10: memref<1x4x8x8xf32, #tpu.memory_space<vmem>>) attributes {dimension_semantics = [#tpu.dimension_semantics<parallel>, #tpu.dimension_semantics<parallel>], iteration_bounds = array<i64: 2, 1>, scalar_prefetch = 0 : i64, scratch_operands = 0 : i64, tpu.core_type = #tpu.core_type<tc>, window_params = [{transform_indices = @transform_0, window_bounds = array<i64: 1, 8, 8>}, {transform_indices = @transform_1, window_bounds = array<i64: 1, 8, 8>}, {transform_indices = @transform_2, window_bounds = array<i64: 1, 8, 8>}, {pipeline_mode = #tpu.pipeline_mode<synchronous>, transform_indices = @transform_3, window_bounds = array<i64: 4, 8, 8>}, {pipeline_mode = #tpu.pipeline_mode<synchronous>, transform_indices = @transform_4, window_bounds = array<i64: 4, 8, 8>}, {pipeline_mode = #tpu.pipeline_mode<synchronous>, transform_indices = @transform_5, window_bounds = array<i64: 4, 8, 8>}, {pipeline_mode = #tpu.pipeline_mode<synchronous>, transform_indices = @transform_6, window_bounds = array<i64: 4, 8, 8>}, {transform_indices = @transform_7, window_bounds = array<i64: 1, 8, 8>}, {transform_indices = @transform_8, window_bounds = array<i64: 1, 4, 8, 8>}]} {
    %c0 = arith.constant 0 : index
    %c0_0 = arith.constant 0 : index
    %c0_1 = arith.constant 0 : index
    %0 = vector.load %arg2[%c0, %c0_0, %c0_1] : memref<1x8x8xf32, #tpu.memory_space<vmem>>, vector<1x8x8xf32>
    %1 = vector.shape_cast %0 : vector<1x8x8xf32> to vector<8x8xf32>
    %c0_2 = arith.constant 0 : index
    %c0_3 = arith.constant 0 : index
    %c0_4 = arith.constant 0 : index
    %2 = vector.load %arg3[%c0_2, %c0_3, %c0_4] : memref<1x8x8xf32, #tpu.memory_space<vmem>>, vector<1x8x8xf32>
    %3 = vector.shape_cast %2 : vector<1x8x8xf32> to vector<8x8xf32>
    %c0_5 = arith.constant 0 : index
    %c0_6 = arith.constant 0 : index
    %c0_7 = arith.constant 0 : index
    %4 = vector.load %arg4[%c0_5, %c0_6, %c0_7] : memref<1x8x8xf32, #tpu.memory_space<vmem>>, vector<1x8x8xf32>
    %5 = vector.shape_cast %4 : vector<1x8x8xf32> to vector<8x8xf32>
    %6 = vector.shape_cast %1 : vector<8x8xf32> to vector<1x8x8xf32>
    %7 = vector.shape_cast %6 : vector<1x8x8xf32> to vector<1x8x8xf32>
    %8 = vector.broadcast %7 : vector<1x8x8xf32> to vector<4x8x8xf32>
    %9 = vector.shape_cast %3 : vector<8x8xf32> to vector<1x8x8xf32>
    %10 = vector.shape_cast %9 : vector<1x8x8xf32> to vector<1x8x8xf32>
    %11 = vector.broadcast %10 : vector<1x8x8xf32> to vector<4x8x8xf32>
    %12 = vector.shape_cast %5 : vector<8x8xf32> to vector<1x8x8xf32>
    %13 = vector.shape_cast %12 : vector<1x8x8xf32> to vector<1x8x8xf32>
    %14 = vector.broadcast %13 : vector<1x8x8xf32> to vector<4x8x8xf32>
    %c0_8 = arith.constant 0 : index
    %c0_9 = arith.constant 0 : index
    %c0_10 = arith.constant 0 : index
    %15 = vector.load %arg5[%c0_8, %c0_9, %c0_10] : memref<4x8x8xf32, #tpu.memory_space<vmem>>, vector<4x8x8xf32>
    "tpu.trace_start"() <{level = 10 : i32, message = "hsq,hqd->hsd"}> : () -> ()
    %cst = arith.constant dense<0.000000e+00> : vector<4x8x8xf32>
    %16 = tpu.matmul %8, %15, %cst {dimension_numbers = #tpu.dot_dimension_numbers<[2], [1], [1], [2], [0, 0, 0, 1, 1, 2], [0], [0]>} : vector<4x8x8xf32>, vector<4x8x8xf32>, vector<4x8x8xf32> -> vector<4x8x8xf32>
    "tpu.trace_stop"() : () -> ()
    %c0_11 = arith.constant 0 : index
    %c0_12 = arith.constant 0 : index
    %c0_13 = arith.constant 0 : index
    %17 = vector.load %arg6[%c0_11, %c0_12, %c0_13] : memref<4x8x8xf32, #tpu.memory_space<vmem>>, vector<4x8x8xf32>
    "tpu.trace_start"() <{level = 10 : i32, message = "hsk,hkd->hsd"}> : () -> ()
    %cst_14 = arith.constant dense<0.000000e+00> : vector<4x8x8xf32>
    %18 = tpu.matmul %11, %17, %cst_14 {dimension_numbers = #tpu.dot_dimension_numbers<[2], [1], [1], [2], [0, 0, 0, 1, 1, 2], [0], [0]>} : vector<4x8x8xf32>, vector<4x8x8xf32>, vector<4x8x8xf32> -> vector<4x8x8xf32>
    "tpu.trace_stop"() : () -> ()
    %c0_15 = arith.constant 0 : index
    %c0_16 = arith.constant 0 : index
    %c0_17 = arith.constant 0 : index
    %19 = vector.load %arg7[%c0_15, %c0_16, %c0_17] : memref<4x8x8xf32, #tpu.memory_space<vmem>>, vector<4x8x8xf32>
    "tpu.trace_start"() <{level = 10 : i32, message = "hsv,hvd->hsd"}> : () -> ()
    %cst_18 = arith.constant dense<0.000000e+00> : vector<4x8x8xf32>
    %20 = tpu.matmul %14, %19, %cst_18 {dimension_numbers = #tpu.dot_dimension_numbers<[2], [1], [1], [2], [0, 0, 0, 1, 1, 2], [0], [0]>} : vector<4x8x8xf32>, vector<4x8x8xf32>, vector<4x8x8xf32> -> vector<4x8x8xf32>
    "tpu.trace_stop"() : () -> ()
    "tpu.trace_start"() <{level = 10 : i32, message = "hqd,hkd->hqk"}> : () -> ()
    %cst_19 = arith.constant dense<0.000000e+00> : vector<4x8x8xf32>
    %21 = tpu.matmul %16, %18, %cst_19 {dimension_numbers = #tpu.dot_dimension_numbers<[2], [2], [1], [1], [0, 0, 0, 1, 1, 1], [0], [0]>} : vector<4x8x8xf32>, vector<4x8x8xf32>, vector<4x8x8xf32> -> vector<4x8x8xf32>
    "tpu.trace_stop"() : () -> ()
    %cst_20 = arith.constant dense<0xFF800000> : vector<4x8xf32>
    %22 = vector.multi_reduction <maximumf>, %21, %cst_20 [2] : vector<4x8x8xf32> to vector<4x8xf32>
    %23 = vector.shape_cast %22 : vector<4x8xf32> to vector<4x8x1xf32>
    %24 = vector.broadcast %23 : vector<4x8x1xf32> to vector<4x8x8xf32>
    %25 = arith.subf %21, %24 : vector<4x8x8xf32>
    %26 = math.exp %25 : vector<4x8x8xf32>
    %cst_21 = arith.constant dense<0.000000e+00> : vector<4x8xf32>
    %27 = vector.multi_reduction <add>, %26, %cst_21 [2] : vector<4x8x8xf32> to vector<4x8xf32>
    %28 = vector.shape_cast %27 : vector<4x8xf32> to vector<4x8x1xf32>
    %29 = vector.broadcast %28 : vector<4x8x1xf32> to vector<4x8x8xf32>
    %30 = arith.divf %26, %29 : vector<4x8x8xf32>
    %c0_22 = arith.constant 0 : index
    %c0_23 = arith.constant 0 : index
    %c0_24 = arith.constant 0 : index
    %c0_25 = arith.constant 0 : index
    %31 = vector.load %arg10[%c0_22, %c0_23, %c0_24, %c0_25] : memref<1x4x8x8xf32, #tpu.memory_space<vmem>>, vector<1x4x8x8xf32>
    %32 = vector.shape_cast %31 : vector<1x4x8x8xf32> to vector<4x8x8xf32>
    %33 = vector.shape_cast %30 : vector<4x8x8xf32> to vector<1x4x8x8xf32>
    tpu.vector_store %arg10[%c0_22, %c0_23, %c0_24, %c0_25], %33 {strides = array<i32>} : memref<1x4x8x8xf32, #tpu.memory_space<vmem>>, vector<1x4x8x8xf32>,
    "tpu.trace_start"() <{level = 10 : i32, message = "hqk,hkd->hqd"}> : () -> ()
    %cst_26 = arith.constant dense<0.000000e+00> : vector<4x8x8xf32>
    %34 = tpu.matmul %30, %20, %cst_26 {dimension_numbers = #tpu.dot_dimension_numbers<[2], [1], [1], [2], [0, 0, 0, 1, 1, 2], [0], [0]>} : vector<4x8x8xf32>, vector<4x8x8xf32>, vector<4x8x8xf32> -> vector<4x8x8xf32>
    "tpu.trace_stop"() : () -> ()
    %c0_27 = arith.constant 0 : index
    %c0_28 = arith.constant 0 : index
    %c0_29 = arith.constant 0 : index
    %35 = vector.load %arg8[%c0_27, %c0_28, %c0_29] : memref<4x8x8xf32, #tpu.memory_space<vmem>>, vector<4x8x8xf32>
    "tpu.trace_start"() <{level = 10 : i32, message = "hqd,hdo->hqo"}> : () -> ()
    %cst_30 = arith.constant dense<0.000000e+00> : vector<4x8x8xf32>
    %36 = tpu.matmul %34, %35, %cst_30 {dimension_numbers = #tpu.dot_dimension_numbers<[2], [1], [1], [2], [0, 0, 0, 1, 1, 2], [0], [0]>} : vector<4x8x8xf32>, vector<4x8x8xf32>, vector<4x8x8xf32> -> vector<4x8x8xf32>
    "tpu.trace_stop"() : () -> ()
    %cst_31 = arith.constant dense<0.000000e+00> : vector<8x8xf32>
    %37 = vector.multi_reduction <add>, %36, %cst_31 [0] : vector<4x8x8xf32> to vector<8x8xf32>
    %c0_32 = arith.constant 0 : index
    %c0_33 = arith.constant 0 : index
    %c0_34 = arith.constant 0 : index
    %38 = vector.load %arg9[%c0_32, %c0_33, %c0_34] : memref<1x8x8xf32, #tpu.memory_space<vmem>>, vector<1x8x8xf32>
    %39 = vector.shape_cast %38 : vector<1x8x8xf32> to vector<8x8xf32>
    %40 = vector.shape_cast %37 : vector<8x8xf32> to vector<1x8x8xf32>
    tpu.vector_store %arg9[%c0_32, %c0_33, %c0_34], %40 {strides = array<i32>} : memref<1x8x8xf32, #tpu.memory_space<vmem>>, vector<1x8x8xf32>,
    return
  }
  func.func @transform_0(%arg0: i32, %arg1: i32) -> (i32, i32, i32) {
    %c0_i32 = arith.constant 0 : i32
    %c0_i32_0 = arith.constant 0 : i32
    return %arg0, %arg1, %c0_i32 : i32, i32, i32
  }
  func.func @transform_1(%arg0: i32, %arg1: i32) -> (i32, i32, i32) {
    %c0_i32 = arith.constant 0 : i32
    %c0_i32_0 = arith.constant 0 : i32
    %c0_i32_1 = arith.constant 0 : i32
    return %arg0, %c0_i32, %c0_i32_0 : i32, i32, i32
  }
  func.func @transform_2(%arg0: i32, %arg1: i32) -> (i32, i32, i32) {
    %c0_i32 = arith.constant 0 : i32
    %c0_i32_0 = arith.constant 0 : i32
    %c0_i32_1 = arith.constant 0 : i32
    return %arg0, %c0_i32, %c0_i32_0 : i32, i32, i32
  }
  func.func @transform_3(%arg0: i32, %arg1: i32) -> (i32, i32, i32) {
    %c0_i32 = arith.constant 0 : i32
    %c0_i32_0 = arith.constant 0 : i32
    %c0_i32_1 = arith.constant 0 : i32
    %c0_i32_2 = arith.constant 0 : i32
    return %c0_i32, %c0_i32_0, %c0_i32_1 : i32, i32, i32
  }
  func.func @transform_4(%arg0: i32, %arg1: i32) -> (i32, i32, i32) {
    %c0_i32 = arith.constant 0 : i32
    %c0_i32_0 = arith.constant 0 : i32
    %c0_i32_1 = arith.constant 0 : i32
    %c0_i32_2 = arith.constant 0 : i32
    return %c0_i32, %c0_i32_0, %c0_i32_1 : i32, i32, i32
  }
  func.func @transform_5(%arg0: i32, %arg1: i32) -> (i32, i32, i32) {
    %c0_i32 = arith.constant 0 : i32
    %c0_i32_0 = arith.constant 0 : i32
    %c0_i32_1 = arith.constant 0 : i32
    %c0_i32_2 = arith.constant 0 : i32
    return %c0_i32, %c0_i32_0, %c0_i32_1 : i32, i32, i32
  }
  func.func @transform_6(%arg0: i32, %arg1: i32) -> (i32, i32, i32) {
    %c0_i32 = arith.constant 0 : i32
    %c0_i32_0 = arith.constant 0 : i32
    %c0_i32_1 = arith.constant 0 : i32
    %c0_i32_2 = arith.constant 0 : i32
    return %c0_i32, %c0_i32_0, %c0_i32_1 : i32, i32, i32
  }
  func.func @transform_7(%arg0: i32, %arg1: i32) -> (i32, i32, i32) {
    %c0_i32 = arith.constant 0 : i32
    %c0_i32_0 = arith.constant 0 : i32
    return %arg0, %arg1, %c0_i32 : i32, i32, i32
  }
  func.func @transform_8(%arg0: i32, %arg1: i32) -> (i32, i32, i32, i32) {
    %c0_i32 = arith.constant 0 : i32
    %c0_i32_0 = arith.constant 0 : i32
    %c0_i32_1 = arith.constant 0 : i32
    return %arg0, %c0_i32, %arg1, %c0_i32_0 : i32, i32, i32, i32
  }
}

</mosaic_0001>

<llo_original>
// kernel: tpu_custom_call.1
$region0: #{tpu_custom_call.1}
  #allocation0 [shape = 'u32[]', space=smem, size = 0x4, offset = 0x4, fixed_abs, tag = 'smem constant byte address 0x4 - core index']
  #allocation1 [shape = 'u32[72,128]{1,0:T(1,128)}', space=vmem, size = 0x9000, scoped, tag = 'internal scratch']
  %s0 = inlined_call_operand.hbm [shape: f32[2,8,8], index: 0, kind: input, shape index: {}]
  %s1 = inlined_call_operand.hbm [shape: f32[2,8,8], index: 1, kind: input, shape index: {}]
  %s2 = inlined_call_operand.hbm [shape: f32[2,8,8], index: 2, kind: input, shape index: {}]
  %s3 = inlined_call_operand.hbm [shape: f32[4,8,8], index: 3, kind: input, shape index: {}]
  %s4 = inlined_call_operand.hbm [shape: f32[4,8,8], index: 4, kind: input, shape index: {}]
  %s5 = inlined_call_operand.hbm [shape: f32[4,8,8], index: 5, kind: input, shape index: {}]
  %s6 = inlined_call_operand.hbm [shape: f32[4,8,8], index: 6, kind: input, shape index: {}]
  %s7 = inlined_call_operand.hbm [shape: f32[2,8,8], index: 7, kind: output, shape index: {0}]
  %s8 = inlined_call_operand.hbm [shape: f32[2,4,8,8], index: 8, kind: output, shape index: {1}]
  %9 = xla_tuple %s7, %s8
  %s10 = sld [smem:[#allocation0]]
  $region97: #{tpu_custom_call.1} parent=0
    _
  %s12 = ssub.s32 1, %s10
  %s13 = scalar_select 0, %s12, %s10
  $region1: #{tpu_custom_call.1} parent=0
    #allocation2 [shape = 'u8[8192]{0}', space=vmem, size = 0x2000, scoped, tag = 'input window, operand 0']
    #allocation3 [shape = 's32[2]{0}', space=sflag, size = 0x8, scoped, tag = 'scoped memory for tpu_custom_call.1']
    #allocation4 [shape = 's32[2]{0}', space=sflag, size = 0x8, scoped, tag = 'scoped memory for tpu_custom_call.1']
    #allocation5 [shape = 'u8[8192]{0}', space=vmem, size = 0x2000, scoped, tag = 'input window, operand 1']
    #allocation6 [shape = 's32[2]{0}', space=sflag, size = 0x8, scoped, tag = 'scoped memory for tpu_custom_call.1']
    #allocation7 [shape = 'u8[8192]{0}', space=vmem, size = 0x2000, scoped, tag = 'input window, operand 2']
    #allocation8 [shape = 'u8[16384]{0}', space=vmem, size = 0x4000, scoped, tag = 'input window, operand 3, single buffered']
    #allocation9 [shape = 's32[1]{0}', space=sflag, size = 0x4, scoped, tag = 'scoped memory for tpu_custom_call.1']
    #allocation10 [shape = 'u8[16384]{0}', space=vmem, size = 0x4000, scoped, tag = 'input window, operand 4, single buffered']
    #allocation11 [shape = 'u8[16384]{0}', space=vmem, size = 0x4000, scoped, tag = 'input window, operand 5, single buffered']
    #allocation12 [shape = 's32[1]{0}', space=sflag, size = 0x4, scoped, tag = 'scoped memory for tpu_custom_call.1']
    #allocation13 [shape = 'u8[16384]{0}', space=vmem, size = 0x4000, scoped, tag = 'input window, operand 6, single buffered']
    #allocation14 [shape = 'u8[8192]{0}', space=vmem, size = 0x2000, scoped, tag = 'output window, operand 0']
    #allocation15 [shape = 'u8[32768]{0}', space=vmem, size = 0x8000, scoped, tag = 'output window, operand 1']
    #allocation16 [shape = 's32[2]{0}', space=sflag, size = 0x8, scoped, tag = 'scoped memory for tpu_custom_call.1']
    %14 = vsyncpa [#allocation3], 0
    %s15 = scalar_lea.sflag [#allocation3], 1
    %16 = vsyncpa %s15, 0
    %17 = vsyncpa [#allocation6], 0
    %s18 = scalar_lea.sflag [#allocation6], 1
    %19 = vsyncpa %s18, 0
    %20 = vsyncpa [#allocation9], 0
    %21 = vsyncpa [#allocation12], 0
    %22 = vsyncpa [#allocation4], 0
    %s23 = scalar_lea.sflag [#allocation4], 1
    %24 = vsyncpa %s23, 0
    %25 = vsyncpa [#allocation16], 0
    %s26 = scalar_lea.sflag [#allocation16], 1
    %27 = vsyncpa %s26, 0
    loop: start=0, step=1, limit=4
    $region2: #{tpu_custom_call.1} parent=1 // loop_pre_header
      _
    $region3: #{tpu_custom_call.1} parent=1 // loop_header
      %s29 = sphi 0, %s33
      %p30 = scmp.ge.s32.totalorder %s29, 4
      %s36 = sphi 0, %s48
      %s37 = sphi 0, %s44
      %s38 = sphi 0, %s36
      %s39 = sphi 0, %s37
      %s40 = sphi 0, %s38
      %s41 = sphi 0, %s39
      %s53 = sphi 0, %s55
      %s56 = sphi 0, %s53
      %s57 = sphi 0, %s56
      %s73 = sphi 0, %s57
      %s79 = sphi 0, %s81
      %s82 = sphi 0, %s79
      %s83 = sphi 0, %s82
      %s99 = sphi 0, %s83
      %s105 = sphi 0, %s107
      %s108 = sphi 0, %s105
      %s109 = sphi 0, %s108
      %s125 = sphi 0, %s109
      %s129 = sphi 0, %s129
      %s131 = sphi 0, %s129
      %s132 = sphi 0, %s131
      %s146 = sphi 0, %s132
      %s150 = sphi 0, %s150
      %s152 = sphi 0, %s150
      %s153 = sphi 0, %s152
      %s167 = sphi 0, %s153
      %s171 = sphi 0, %s171
      %s173 = sphi 0, %s171
      %s174 = sphi 0, %s173
      %s188 = sphi 0, %s174
      %s192 = sphi 0, %s192
      %s194 = sphi 0, %s192
      %s195 = sphi 0, %s194
      %s209 = sphi 0, %s195
      %s217 = sphi 0, %s219
      %s220 = sphi 0, %s217
      %s221 = sphi 0, %s220
      %s237 = sphi 0, %s221
      %s245 = sphi 0, %s247
      %s248 = sphi 0, %s245
      %s249 = sphi 0, %s248
      %s265 = sphi 0, %s249
    $region4: #{tpu_custom_call.1} parent=1 // loop_header_branch
      %32 = sbr.rel (%p30) target = $region8
    $region5: #{tpu_custom_call.1} parent=1 // loop_body
      %s34 = ssub.s32 %s29, 1
      %s35 = ssub.s32 %s29, 2
      %s42 = sadd.s32 1, %s37
      %p43 = scmp.ge.s32.totalorder %s42, 1
      %s44 = scalar_select %p43, 0, %s42
      %s45 = sadd.s32 1, %s36
      %s46 = scalar_select %p43, %s45, %s36
      %p47 = scmp.ge.s32.totalorder %s46, 2
      %s48 = scalar_select %p47, 0, %s46
      %s49 = ssub.s32 %s36, %s48
      %s50 = ssub.s32 %s37, %s44
      %s51 = sor.u32 %s49, %s50
      %p52 = scmp.eq.s32.totalorder %s51, 0
      %s54 = sadd.s32 %s53, 1
      %s55 = scalar_select %p52, %s53, %s54
      %p58 = pneg %p52
      %p59 = scmp.eq.s32.totalorder %s29, 1
      %p60 = por %p58, %p59
      %p61 = scmp.ne.s32.totalorder %s53, %s56
      %p62 = scmp.eq.s32.totalorder %s29, 0
      %p63 = por %p61, %p62
      %p64 = scmp.ne.s32.totalorder %s53, %s56
      %p65 = scmp.eq.s32.totalorder %s34, 1
      %p66 = por %p64, %p65
      %p67 = scmp.ne.s32.totalorder %s56, %s57
      %p68 = scmp.eq.s32.totalorder %s34, 0
      %p69 = por %p67, %p68
      %p70 = scmp.ne.s32.totalorder %s56, %s57
      %p71 = scmp.eq.s32.totalorder %s35, 1
      %p72 = por %p70, %p71
      %p74 = scmp.ne.s32.totalorder %s57, %s73
      %p75 = scmp.eq.s32.totalorder %s35, 0
      %p76 = por %p74, %p75
      %s77 = ssub.s32 %s36, %s48
      %p78 = scmp.eq.s32.totalorder %s77, 0
      %s80 = sadd.s32 %s79, 1
      %s81 = scalar_select %p78, %s79, %s80
      %p84 = pneg %p78
      %p85 = scmp.eq.s32.totalorder %s29, 1
      %p86 = por %p84, %p85
      %p87 = scmp.ne.s32.totalorder %s79, %s82
      %p88 = scmp.eq.s32.totalorder %s29, 0
      %p89 = por %p87, %p88
      %p90 = scmp.ne.s32.totalorder %s79, %s82
      %p91 = scmp.eq.s32.totalorder %s34, 1
      %p92 = por %p90, %p91
      %p93 = scmp.ne.s32.totalorder %s82, %s83
      %p94 = scmp.eq.s32.totalorder %s34, 0
      %p95 = por %p93, %p94
      %p96 = scmp.ne.s32.totalorder %s82, %s83
      %p97 = scmp.eq.s32.totalorder %s35, 1
      %p98 = por %p96, %p97
      %p100 = scmp.ne.s32.totalorder %s83, %s99
      %p101 = scmp.eq.s32.totalorder %s35, 0
      %p102 = por %p100, %p101
      %s103 = ssub.s32 %s36, %s48
      %p104 = scmp.eq.s32.totalorder %s103, 0
      %s106 = sadd.s32 %s105, 1
      %s107 = scalar_select %p104, %s105, %s106
      %p110 = pneg %p104
      %p111 = scmp.eq.s32.totalorder %s29, 1
      %p112 = por %p110, %p111
      %p113 = scmp.ne.s32.totalorder %s105, %s108
      %p114 = scmp.eq.s32.totalorder %s29, 0
      %p115 = por %p113, %p114
      %p116 = scmp.ne.s32.totalorder %s105, %s108
      %p117 = scmp.eq.s32.totalorder %s34, 1
      %p118 = por %p116, %p117
      %p119 = scmp.ne.s32.totalorder %s108, %s109
      %p120 = scmp.eq.s32.totalorder %s34, 0
      %p121 = por %p119, %p120
      %p122 = scmp.ne.s32.totalorder %s108, %s109
      %p123 = scmp.eq.s32.totalorder %s35, 1
      %p124 = por %p122, %p123
      %p126 = scmp.ne.s32.totalorder %s109, %s125
      %p127 = scmp.eq.s32.totalorder %s35, 0
      %p128 = por %p126, %p127
      %s130 = sadd.s32 %s129, 1
      %p133 = scmp.eq.s32.totalorder %s29, 1
      %p134 = scmp.ne.s32.totalorder %s129, %s131
      %p135 = scmp.eq.s32.totalorder %s29, 0
      %p136 = por %p134, %p135
      %p137 = scmp.ne.s32.totalorder %s129, %s131
      %p138 = scmp.eq.s32.totalorder %s34, 1
      %p139 = por %p137, %p138
      %p140 = scmp.ne.s32.totalorder %s131, %s132
      %p141 = scmp.eq.s32.totalorder %s34, 0
      %p142 = por %p140, %p141
      %p143 = scmp.ne.s32.totalorder %s131, %s132
      %p144 = scmp.eq.s32.totalorder %s35, 1
      %p145 = por %p143, %p144
      %p147 = scmp.ne.s32.totalorder %s132, %s146
      %p148 = scmp.eq.s32.totalorder %s35, 0
      %p149 = por %p147, %p148
      %s151 = sadd.s32 %s150, 1
      %p154 = scmp.eq.s32.totalorder %s29, 1
      %p155 = scmp.ne.s32.totalorder %s150, %s152
      %p156 = scmp.eq.s32.totalorder %s29, 0
      %p157 = por %p155, %p156
      %p158 = scmp.ne.s32.totalorder %s150, %s152
      %p159 = scmp.eq.s32.totalorder %s34, 1
      %p160 = por %p158, %p159
      %p161 = scmp.ne.s32.totalorder %s152, %s153
      %p162 = scmp.eq.s32.totalorder %s34, 0
      %p163 = por %p161, %p162
      %p164 = scmp.ne.s32.totalorder %s152, %s153
      %p165 = scmp.eq.s32.totalorder %s35, 1
      %p166 = por %p164, %p165
      %p168 = scmp.ne.s32.totalorder %s153, %s167
      %p169 = scmp.eq.s32.totalorder %s35, 0
      %p170 = por %p168, %p169
      %s172 = sadd.s32 %s171, 1
      %p175 = scmp.eq.s32.totalorder %s29, 1
      %p176 = scmp.ne.s32.totalorder %s171, %s173
      %p177 = scmp.eq.s32.totalorder %s29, 0
      %p178 = por %p176, %p177
      %p179 = scmp.ne.s32.totalorder %s171, %s173
      %p180 = scmp.eq.s32.totalorder %s34, 1
      %p181 = por %p179, %p180
      %p182 = scmp.ne.s32.totalorder %s173, %s174
      %p183 = scmp.eq.s32.totalorder %s34, 0
      %p184 = por %p182, %p183
      %p185 = scmp.ne.s32.totalorder %s173, %s174
      %p186 = scmp.eq.s32.totalorder %s35, 1
      %p187 = por %p185, %p186
      %p189 = scmp.ne.s32.totalorder %s174, %s188
      %p190 = scmp.eq.s32.totalorder %s35, 0
      %p191 = por %p189, %p190
      %s193 = sadd.s32 %s192, 1
      %p196 = scmp.eq.s32.totalorder %s29, 1
      %p197 = scmp.ne.s32.totalorder %s192, %s194
      %p198 = scmp.eq.s32.totalorder %s29, 0
      %p199 = por %p197, %p198
      %p200 = scmp.ne.s32.totalorder %s192, %s194
      %p201 = scmp.eq.s32.totalorder %s34, 1
      %p202 = por %p200, %p201
      %p203 = scmp.ne.s32.totalorder %s194, %s195
      %p204 = scmp.eq.s32.totalorder %s34, 0
      %p205 = por %p203, %p204
      %p206 = scmp.ne.s32.totalorder %s194, %s195
      %p207 = scmp.eq.s32.totalorder %s35, 1
      %p208 = por %p206, %p207
      %p210 = scmp.ne.s32.totalorder %s195, %s209
      %p211 = scmp.eq.s32.totalorder %s35, 0
      %p212 = por %p210, %p211
      %s213 = ssub.s32 %s36, %s48
      %s214 = ssub.s32 %s37, %s44
      %s215 = sor.u32 %s213, %s214
      %p216 = scmp.eq.s32.totalorder %s215, 0
      %s218 = sadd.s32 %s217, 1
      %s219 = scalar_select %p216, %s217, %s218
      %p222 = pneg %p216
      %p223 = scmp.eq.s32.totalorder %s29, 1
      %p224 = por %p222, %p223
      %p225 = scmp.ne.s32.totalorder %s217, %s220
      %p226 = scmp.eq.s32.totalorder %s29, 0
      %p227 = por %p225, %p226
      %p228 = scmp.ne.s32.totalorder %s217, %s220
      %p229 = scmp.eq.s32.totalorder %s34, 1
      %p230 = por %p228, %p229
      %p231 = scmp.ne.s32.totalorder %s220, %s221
      %p232 = scmp.eq.s32.totalorder %s34, 0
      %p233 = por %p231, %p232
      %p234 = scmp.ne.s32.totalorder %s220, %s221
      %p235 = scmp.eq.s32.totalorder %s35, 1
      %p236 = por %p234, %p235
      %p238 = scmp.ne.s32.totalorder %s221, %s237
      %p239 = scmp.eq.s32.totalorder %s35, 0
      %p240 = por %p238, %p239
      %s241 = ssub.s32 %s36, %s48
      %s242 = ssub.s32 %s37, %s44
      %s243 = sor.u32 %s241, %s242
      %p244 = scmp.eq.s32.totalorder %s243, 0
      %s246 = sadd.s32 %s245, 1
      %s247 = scalar_select %p244, %s245, %s246
      %p250 = pneg %p244
      %p251 = scmp.eq.s32.totalorder %s29, 1
      %p252 = por %p250, %p251
      %p253 = scmp.ne.s32.totalorder %s245, %s248
      %p254 = scmp.eq.s32.totalorder %s29, 0
      %p255 = por %p253, %p254
      %p256 = scmp.ne.s32.totalorder %s245, %s248
      %p257 = scmp.eq.s32.totalorder %s34, 1
      %p258 = por %p256, %p257
      %p259 = scmp.ne.s32.totalorder %s248, %s249
      %p260 = scmp.eq.s32.totalorder %s34, 0
      %p261 = por %p259, %p260
      %p262 = scmp.ne.s32.totalorder %s248, %s249
      %p263 = scmp.eq.s32.totalorder %s35, 1
      %p264 = por %p262, %p263
      %p266 = scmp.ne.s32.totalorder %s249, %s265
      %p267 = scmp.eq.s32.totalorder %s35, 0
      %p268 = por %p266, %p267
      %p269 = scmp.le.s32.totalorder 1, %s29
      %p270 = scmp.lt.s32.totalorder %s29, 3
      %p271 = pnand %p269, %p270
      %p272 = pneg %p271
      // Predicated region
      $region9: #{tpu_custom_call.1} parent=5 // pred_check
        _
      $region10: #{tpu_custom_call.1} parent=5 // pred_check_branch
        %274 = sbr.rel (%p271) target = $region12
      $region11: #{tpu_custom_call.1} parent=5 // pred_region
        %s275 = ssub.s32 %s29, 1
        // Predicated region
        $region13: #{tpu_custom_call.1} parent=11 // pred_check
          %p276 = pneg %p142
        $region14: #{tpu_custom_call.1} parent=11 // pred_check_branch
          %278 = sbr.rel (%p276) target = $region16
        $region15: #{tpu_custom_call.1} parent=11 // pred_region
          %280 = vsyncadd [#allocation9], 0
          %s281 = sshll.u32 %s3, 4
          %s282 = int_to_ptr.hbm [resolvable:$true] %s281
          %s283 = sshll.u32 [#allocation8], 4
          %s284 = int_to_ptr.vmem [resolvable:$true] %s283
          %289 = dma.hbm_to_vmem [thread:$0]  %s282, 512, %s284, [#allocation9], 128, 128, 8
        $region16: #{tpu_custom_call.1} parent=11 // pred_fallthru
          _
        // Predicated region
        $region17: #{tpu_custom_call.1} parent=11 // pred_check
          %p290 = pneg %p163
        $region18: #{tpu_custom_call.1} parent=11 // pred_check_branch
          %292 = sbr.rel (%p290) target = $region20
        $region19: #{tpu_custom_call.1} parent=11 // pred_region
          %294 = vsyncadd [#allocation9], 0
          %s295 = sshll.u32 %s4, 4
          %s296 = int_to_ptr.hbm [resolvable:$true] %s295
          %s297 = sshll.u32 [#allocation10], 4
          %s298 = int_to_ptr.vmem [resolvable:$true] %s297
          %303 = dma.hbm_to_vmem [thread:$0]  %s296, 512, %s298, [#allocation9], 128, 128, 8
        $region20: #{tpu_custom_call.1} parent=11 // pred_fallthru
          _
        // Predicated region
        $region21: #{tpu_custom_call.1} parent=11 // pred_check
          %p304 = pneg %p184
        $region22: #{tpu_custom_call.1} parent=11 // pred_check_branch
          %306 = sbr.rel (%p304) target = $region24
        $region23: #{tpu_custom_call.1} parent=11 // pred_region
          %308 = vsyncadd [#allocation12], 0
          %s309 = sshll.u32 %s5, 4
          %s310 = int_to_ptr.hbm [resolvable:$true] %s309
          %s311 = sshll.u32 [#allocation11], 4
          %s312 = int_to_ptr.vmem [resolvable:$true] %s311
          %317 = dma.hbm_to_vmem [thread:$0]  %s310, 512, %s312, [#allocation12], 128, 128, 8
        $region24: #{tpu_custom_call.1} parent=11 // pred_fallthru
          _
        // Predicated region
        $region25: #{tpu_custom_call.1} parent=11 // pred_check
          %p318 = pneg %p205
        $region26: #{tpu_custom_call.1} parent=11 // pred_check_branch
          %320 = sbr.rel (%p318) target = $region28
        $region27: #{tpu_custom_call.1} parent=11 // pred_region
          %322 = vsyncadd [#allocation12], 0
          %s323 = sshll.u32 %s6, 4
          %s324 = int_to_ptr.hbm [resolvable:$true] %s323
          %s325 = sshll.u32 [#allocation13], 4
          %s326 = int_to_ptr.vmem [resolvable:$true] %s325
          %331 = dma.hbm_to_vmem [thread:$0]  %s324, 512, %s326, [#allocation12], 128, 128, 8
        $region28: #{tpu_custom_call.1} parent=11 // pred_fallthru
          _
      $region12: #{tpu_custom_call.1} parent=5 // pred_fallthru
        _
      %p332 = scmp.lt.s32.totalorder %s29, 2
      // Predicated region
      $region29: #{tpu_custom_call.1} parent=5 // pred_check
        %p333 = pneg %p332
      $region30: #{tpu_custom_call.1} parent=5 // pred_check_branch
        %335 = sbr.rel (%p333) target = $region32
      $region31: #{tpu_custom_call.1} parent=5 // pred_region
        // Predicated region
        $region33: #{tpu_custom_call.1} parent=31 // pred_check
          %p336 = pneg %p63
        $region34: #{tpu_custom_call.1} parent=31 // pred_check_branch
          %338 = sbr.rel (%p336) target = $region36
        $region35: #{tpu_custom_call.1} parent=31 // pred_region
          %s339 = sand.u32 %s53, 1
          %s340 = scalar_lea.sflag [#allocation3], %s339
          %s341 = sand.u32 %s53, 1
          %s342 = smul.addr %s341, 8
          %s343 = scalar_lea.vmem [#allocation2], %s342
          %345 = vsyncadd %s340, 0
          %s346 = sadd.s32 %s37, %s36
          %s347 = smul.addr %s346, 8
          %s348 = scalar_lea.hbm %s0, %s347
          %s350 = sshll.u32 %s348, 4
          %s351 = int_to_ptr.hbm [resolvable:$true] %s350
          %s352 = sshll.u32 %s343, 4
          %s353 = int_to_ptr.vmem [resolvable:$true] %s352
          %355 = dma.hbm_to_vmem [thread:$0]  %s351, 128, %s353, %s340
        $region36: #{tpu_custom_call.1} parent=31 // pred_fallthru
          _
        // Predicated region
        $region37: #{tpu_custom_call.1} parent=31 // pred_check
          %p356 = pneg %p89
        $region38: #{tpu_custom_call.1} parent=31 // pred_check_branch
          %358 = sbr.rel (%p356) target = $region40
        $region39: #{tpu_custom_call.1} parent=31 // pred_region
          %s359 = sand.u32 %s29, 1
          %s360 = scalar_lea.sflag [#allocation6], %s359
          %s361 = sand.u32 %s79, 1
          %s362 = smul.addr %s361, 8
          %s363 = scalar_lea.vmem [#allocation5], %s362
          %365 = vsyncadd %s360, 0
          %s366 = smul.addr %s36, 8
          %s367 = scalar_lea.hbm %s1, %s366
          %s369 = sshll.u32 %s367, 4
          %s370 = int_to_ptr.hbm [resolvable:$true] %s369
          %s371 = sshll.u32 %s363, 4
          %s372 = int_to_ptr.vmem [resolvable:$true] %s371
          %374 = dma.hbm_to_vmem [thread:$0]  %s370, 128, %s372, %s360
        $region40: #{tpu_custom_call.1} parent=31 // pred_fallthru
          _
        // Predicated region
        $region41: #{tpu_custom_call.1} parent=31 // pred_check
          %p375 = pneg %p115
        $region42: #{tpu_custom_call.1} parent=31 // pred_check_branch
          %377 = sbr.rel (%p375) target = $region44
        $region43: #{tpu_custom_call.1} parent=31 // pred_region
          %s378 = sand.u32 %s29, 1
          %s379 = scalar_lea.sflag [#allocation6], %s378
          %s380 = sand.u32 %s105, 1
          %s381 = smul.addr %s380, 8
          %s382 = scalar_lea.vmem [#allocation7], %s381
          %384 = vsyncadd %s379, 0
          %s385 = smul.addr %s36, 8
          %s386 = scalar_lea.hbm %s2, %s385
          %s388 = sshll.u32 %s386, 4
          %s389 = int_to_ptr.hbm [resolvable:$true] %s388
          %s390 = sshll.u32 %s382, 4
          %s391 = int_to_ptr.vmem [resolvable:$true] %s390
          %393 = dma.hbm_to_vmem [thread:$0]  %s389, 128, %s391, %s379
        $region44: #{tpu_custom_call.1} parent=31 // pred_fallthru
          _
      $region32: #{tpu_custom_call.1} parent=5 // pred_fallthru
        _
      %p394 = scmp.le.s32.totalorder 1, %s29
      %p395 = scmp.lt.s32.totalorder %s29, 3
      %p396 = pnand %p394, %p395
      %p397 = pneg %p396
      // Predicated region
      $region45: #{tpu_custom_call.1} parent=5 // pred_check
        _
      $region46: #{tpu_custom_call.1} parent=5 // pred_check_branch
        %399 = sbr.rel (%p396) target = $region48
      $region47: #{tpu_custom_call.1} parent=5 // pred_region
        %s400 = ssub.s32 %s29, 1
        %s401 = sand.u32 %s56, 1
        %s402 = scalar_lea.sflag [#allocation3], %s401
        %s403 = sand.u32 %s56, 1
        %s404 = smul.addr %s403, 8
        %s405 = scalar_lea.vmem [#allocation2], %s404
        // Predicated region
        $region49: #{tpu_custom_call.1} parent=47 // pred_check
          %p406 = pneg %p69
        $region50: #{tpu_custom_call.1} parent=47 // pred_check_branch
          %408 = sbr.rel (%p406) target = $region52
        $region51: #{tpu_custom_call.1} parent=47 // pred_region
          %410 = dma.done %s402, 128
        $region52: #{tpu_custom_call.1} parent=47 // pred_fallthru
          _
        %s411 = sand.u32 %s34, 1
        %s412 = scalar_lea.sflag [#allocation6], %s411
        %s413 = sand.u32 %s82, 1
        %s414 = smul.addr %s413, 8
        %s415 = scalar_lea.vmem [#allocation5], %s414
        // Predicated region
        $region53: #{tpu_custom_call.1} parent=47 // pred_check
          %p416 = pneg %p95
        $region54: #{tpu_custom_call.1} parent=47 // pred_check_branch
          %418 = sbr.rel (%p416) target = $region56
        $region55: #{tpu_custom_call.1} parent=47 // pred_region
          %420 = dma.done %s412, 128
        $region56: #{tpu_custom_call.1} parent=47 // pred_fallthru
          _
        %s421 = sand.u32 %s34, 1
        %s422 = scalar_lea.sflag [#allocation6], %s421
        %s423 = sand.u32 %s108, 1
        %s424 = smul.addr %s423, 8
        %s425 = scalar_lea.vmem [#allocation7], %s424
        // Predicated region
        $region57: #{tpu_custom_call.1} parent=47 // pred_check
          %p426 = pneg %p121
        $region58: #{tpu_custom_call.1} parent=47 // pred_check_branch
          %428 = sbr.rel (%p426) target = $region60
        $region59: #{tpu_custom_call.1} parent=47 // pred_region
          %430 = dma.done %s422, 128
        $region60: #{tpu_custom_call.1} parent=47 // pred_fallthru
          _
        // Predicated region
        $region61: #{tpu_custom_call.1} parent=47 // pred_check
          %p431 = pneg %p142
        $region62: #{tpu_custom_call.1} parent=47 // pred_check_branch
          %433 = sbr.rel (%p431) target = $region64
        $region63: #{tpu_custom_call.1} parent=47 // pred_region
          %435 = dma.done [#allocation9], 512
        $region64: #{tpu_custom_call.1} parent=47 // pred_fallthru
          _
        // Predicated region
        $region65: #{tpu_custom_call.1} parent=47 // pred_check
          %p436 = pneg %p163
        $region66: #{tpu_custom_call.1} parent=47 // pred_check_branch
          %438 = sbr.rel (%p436) target = $region68
        $region67: #{tpu_custom_call.1} parent=47 // pred_region
          %440 = dma.done [#allocation9], 512
        $region68: #{tpu_custom_call.1} parent=47 // pred_fallthru
          _
        // Predicated region
        $region69: #{tpu_custom_call.1} parent=47 // pred_check
          %p441 = pneg %p184
        $region70: #{tpu_custom_call.1} parent=47 // pred_check_branch
          %443 = sbr.rel (%p441) target = $region72
        $region71: #{tpu_custom_call.1} parent=47 // pred_region
          %445 = dma.done [#allocation12], 512
        $region72: #{tpu_custom_call.1} parent=47 // pred_fallthru
          _
        // Predicated region
        $region73: #{tpu_custom_call.1} parent=47 // pred_check
          %p446 = pneg %p205
        $region74: #{tpu_custom_call.1} parent=47 // pred_check_branch
          %448 = sbr.rel (%p446) target = $region76
        $region75: #{tpu_custom_call.1} parent=47 // pred_region
          %450 = dma.done [#allocation12], 512
        $region76: #{tpu_custom_call.1} parent=47 // pred_fallthru
          _
        %s451 = sand.u32 %s56, 1
        %s452 = scalar_lea.sflag [#allocation3], %s451
        %s453 = sand.u32 %s56, 1
        %s454 = smul.addr %s453, 8
        %s455 = scalar_lea.vmem [#allocation2], %s454
        %p456 = pneg %p69
        %p457 = pneg %p66
        %s458 = sand.u32 %s34, 1
        %s459 = scalar_lea.sflag [#allocation6], %s458
        %s460 = sand.u32 %s82, 1
        %s461 = smul.addr %s460, 8
        %s462 = scalar_lea.vmem [#allocation5], %s461
        %p463 = pneg %p95
        %p464 = pneg %p92
        %s465 = sand.u32 %s34, 1
        %s466 = scalar_lea.sflag [#allocation6], %s465
        %s467 = sand.u32 %s108, 1
        %s468 = smul.addr %s467, 8
        %s469 = scalar_lea.vmem [#allocation7], %s468
        %p470 = pneg %p121
        %p471 = pneg %p118
        %p472 = pneg %p142
        %p473 = pneg %p139
        %p474 = pneg %p163
        %p475 = pneg %p160
        %p476 = pneg %p184
        %p477 = pneg %p181
        %p478 = pneg %p205
        %p479 = pneg %p202
        %p480 = pneg %p233
        %p481 = pneg %p230
        %s482 = sand.u32 %s220, 1
        %s483 = scalar_lea.sflag [#allocation4], %s482
        %s484 = sand.u32 %s220, 1
        %s485 = smul.addr %s484, 8
        %s486 = scalar_lea.vmem [#allocation14], %s485
        %p487 = pneg %p261
        %p488 = pneg %p258
        %s489 = sand.u32 %s248, 1
        %s490 = scalar_lea.sflag [#allocation16], %s489
        %s491 = sand.u32 %s248, 1
        %s492 = smul.addr %s491, 32
        %s493 = scalar_lea.vmem [#allocation15], %s492
        %v494 = vld [vmem:[%s405] sm:$0xff]
        %v495 = vld [vmem:[%s415] sm:$0xff]
        %v496 = vld [vmem:[%s425] sm:$0xff]
        %v497 = vld [vmem:[#allocation8] sm:$0xff]
        %v498 = vld [vmem:[#allocation8 + $0x8] sm:$0xff]
        %v499 = vld [vmem:[#allocation8 + $0x10] sm:$0xff]
        %v500 = vld [vmem:[#allocation8 + $0x18] sm:$0xff]
        %vm501 = vcmask 64512
        %v503 = vsel %vm501, %v494, 0
        %505 = vmatpush.msra.mxu0 0.0
        %506 = vmatpush.msra.mxu0 0.0
        %507 = vmatpush.msra.mxu0 0.0
        %508 = vmatpush.msra.mxu0 0.0
        %509 = vmatpush.msra.mxu0 0.0
        %510 = vmatpush.msra.mxu0 0.0
        %511 = vmatpush.msra.mxu0 0.0
        %512 = vmatpush.msra.mxu0 0.0
        %513 = vmatpush.msra.mxu0 0.0
        %514 = vmatpush.msra.mxu0 0.0
        %515 = vmatpush.msra.mxu0 0.0
        %516 = vmatpush.msra.mxu0 0.0
        %517 = vmatpush.msra.mxu0 0.0
        %518 = vmatpush.msra.mxu0 0.0
        %519 = vmatpush.msra.mxu0 0.0
        %520 = vmatpush.msra.mxu0 %v497
        %521 = vmatmul.f32.gmra.mxu0 %v503
        %v522 = vpop.f32.mrf.mxu0
        %v523 = vadd.f32 0.0, %v522
        %524 = vdwg.mxu0
        %525 = vmatpush.msra.mxu0 0.0
        %526 = vmatpush.msra.mxu0 0.0
        %527 = vmatpush.msra.mxu0 0.0
        %528 = vmatpush.msra.mxu0 0.0
        %529 = vmatpush.msra.mxu0 0.0
        %530 = vmatpush.msra.mxu0 0.0
        %531 = vmatpush.msra.mxu0 0.0
        %532 = vmatpush.msra.mxu0 0.0
        %533 = vmatpush.msra.mxu0 0.0
        %534 = vmatpush.msra.mxu0 0.0
        %535 = vmatpush.msra.mxu0 0.0
        %536 = vmatpush.msra.mxu0 0.0
        %537 = vmatpush.msra.mxu0 0.0
        %538 = vmatpush.msra.mxu0 0.0
        %539 = vmatpush.msra.mxu0 0.0
        %540 = vmatpush.msra.mxu0 %v498
        %541 = vmatmul.f32.gmra.mxu0 %v503
        %v542 = vpop.f32.mrf.mxu0
        %v543 = vadd.f32 0.0, %v542
        %544 = vdwg.mxu0
        %545 = vmatpush.msra.mxu0 0.0
        %546 = vmatpush.msra.mxu0 0.0
        %547 = vmatpush.msra.mxu0 0.0
        %548 = vmatpush.msra.mxu0 0.0
        %549 = vmatpush.msra.mxu0 0.0
        %550 = vmatpush.msra.mxu0 0.0
        %551 = vmatpush.msra.mxu0 0.0
        %552 = vmatpush.msra.mxu0 0.0
        %553 = vmatpush.msra.mxu0 0.0
        %554 = vmatpush.msra.mxu0 0.0
        %555 = vmatpush.msra.mxu0 0.0
        %556 = vmatpush.msra.mxu0 0.0
        %557 = vmatpush.msra.mxu0 0.0
        %558 = vmatpush.msra.mxu0 0.0
        %559 = vmatpush.msra.mxu0 0.0
        %560 = vmatpush.msra.mxu0 %v499
        %561 = vmatmul.f32.gmra.mxu0 %v503
        %v562 = vpop.f32.mrf.mxu0
        %v563 = vadd.f32 0.0, %v562
        %564 = vdwg.mxu0
        %565 = vmatpush.msra.mxu0 0.0
        %566 = vmatpush.msra.mxu0 0.0
        %567 = vmatpush.msra.mxu0 0.0
        %568 = vmatpush.msra.mxu0 0.0
        %569 = vmatpush.msra.mxu0 0.0
        %570 = vmatpush.msra.mxu0 0.0
        %571 = vmatpush.msra.mxu0 0.0
        %572 = vmatpush.msra.mxu0 0.0
        %573 = vmatpush.msra.mxu0 0.0
        %574 = vmatpush.msra.mxu0 0.0
        %575 = vmatpush.msra.mxu0 0.0
        %576 = vmatpush.msra.mxu0 0.0
        %577 = vmatpush.msra.mxu0 0.0
        %578 = vmatpush.msra.mxu0 0.0
        %579 = vmatpush.msra.mxu0 0.0
        %580 = vmatpush.msra.mxu0 %v500
        %581 = vmatmul.f32.gmra.mxu0 %v503
        %v582 = vpop.f32.mrf.mxu0
        %v583 = vadd.f32 0.0, %v582
        %584 = vdwg.mxu0
        %v585 = vld [vmem:[#allocation10] sm:$0xff]
        %v586 = vld [vmem:[#allocation10 + $0x8] sm:$0xff]
        %v587 = vld [vmem:[#allocation10 + $0x10] sm:$0xff]
        %v588 = vld [vmem:[#allocation10 + $0x18] sm:$0xff]
        %v590 = vsel %vm501, %v495, 0
        %592 = vmatpush.msra.mxu0 0.0
        %593 = vmatpush.msra.mxu0 0.0
        %594 = vmatpush.msra.mxu0 0.0
        %595 = vmatpush.msra.mxu0 0.0
        %596 = vmatpush.msra.mxu0 0.0
        %597 = vmatpush.msra.mxu0 0.0
        %598 = vmatpush.msra.mxu0 0.0
        %599 = vmatpush.msra.mxu0 0.0
        %600 = vmatpush.msra.mxu0 0.0
        %601 = vmatpush.msra.mxu0 0.0
        %602 = vmatpush.msra.mxu0 0.0
        %603 = vmatpush.msra.mxu0 0.0
        %604 = vmatpush.msra.mxu0 0.0
        %605 = vmatpush.msra.mxu0 0.0
        %606 = vmatpush.msra.mxu0 0.0
        %607 = vmatpush.msra.mxu0 %v585
        %608 = vmatmul.f32.gmra.mxu0 %v590
        %v609 = vpop.f32.mrf.mxu0
        %v610 = vadd.f32 0.0, %v609
        %611 = vdwg.mxu0
        %612 = vmatpush.msra.mxu0 0.0
        %613 = vmatpush.msra.mxu0 0.0
        %614 = vmatpush.msra.mxu0 0.0
        %615 = vmatpush.msra.mxu0 0.0
        %616 = vmatpush.msra.mxu0 0.0
        %617 = vmatpush.msra.mxu0 0.0
        %618 = vmatpush.msra.mxu0 0.0
        %619 = vmatpush.msra.mxu0 0.0
        %620 = vmatpush.msra.mxu0 0.0
        %621 = vmatpush.msra.mxu0 0.0
        %622 = vmatpush.msra.mxu0 0.0
        %623 = vmatpush.msra.mxu0 0.0
        %624 = vmatpush.msra.mxu0 0.0
        %625 = vmatpush.msra.mxu0 0.0
        %626 = vmatpush.msra.mxu0 0.0
        %627 = vmatpush.msra.mxu0 %v586
        %628 = vmatmul.f32.gmra.mxu0 %v590
        %v629 = vpop.f32.mrf.mxu0
        %v630 = vadd.f32 0.0, %v629
        %631 = vdwg.mxu0
        %632 = vmatpush.msra.mxu0 0.0
        %633 = vmatpush.msra.mxu0 0.0
        %634 = vmatpush.msra.mxu0 0.0
        %635 = vmatpush.msra.mxu0 0.0
        %636 = vmatpush.msra.mxu0 0.0
        %637 = vmatpush.msra.mxu0 0.0
        %638 = vmatpush.msra.mxu0 0.0
        %639 = vmatpush.msra.mxu0 0.0
        %640 = vmatpush.msra.mxu0 0.0
        %641 = vmatpush.msra.mxu0 0.0
        %642 = vmatpush.msra.mxu0 0.0
        %643 = vmatpush.msra.mxu0 0.0
        %644 = vmatpush.msra.mxu0 0.0
        %645 = vmatpush.msra.mxu0 0.0
        %646 = vmatpush.msra.mxu0 0.0
        %647 = vmatpush.msra.mxu0 %v587
        %648 = vmatmul.f32.gmra.mxu0 %v590
        %v649 = vpop.f32.mrf.mxu0
        %v650 = vadd.f32 0.0, %v649
        %651 = vdwg.mxu0
        %652 = vmatpush.msra.mxu0 0.0
        %653 = vmatpush.msra.mxu0 0.0
        %654 = vmatpush.msra.mxu0 0.0
        %655 = vmatpush.msra.mxu0 0.0
        %656 = vmatpush.msra.mxu0 0.0
        %657 = vmatpush.msra.mxu0 0.0
        %658 = vmatpush.msra.mxu0 0.0
        %659 = vmatpush.msra.mxu0 0.0
        %660 = vmatpush.msra.mxu0 0.0
        %661 = vmatpush.msra.mxu0 0.0
        %662 = vmatpush.msra.mxu0 0.0
        %663 = vmatpush.msra.mxu0 0.0
        %664 = vmatpush.msra.mxu0 0.0
        %665 = vmatpush.msra.mxu0 0.0
        %666 = vmatpush.msra.mxu0 0.0
        %667 = vmatpush.msra.mxu0 %v588
        %668 = vmatmul.f32.gmra.mxu0 %v590
        %v669 = vpop.f32.mrf.mxu0
        %v670 = vadd.f32 0.0, %v669
        %671 = vdwg.mxu0
        %v672 = vld [vmem:[#allocation11] sm:$0xff]
        %v673 = vld [vmem:[#allocation11 + $0x8] sm:$0xff]
        %v674 = vld [vmem:[#allocation11 + $0x10] sm:$0xff]
        %v675 = vld [vmem:[#allocation11 + $0x18] sm:$0xff]
        %v677 = vsel %vm501, %v496, 0
        %679 = vmatpush.msra.mxu0 0.0
        %680 = vmatpush.msra.mxu0 0.0
        %681 = vmatpush.msra.mxu0 0.0
        %682 = vmatpush.msra.mxu0 0.0
        %683 = vmatpush.msra.mxu0 0.0
        %684 = vmatpush.msra.mxu0 0.0
        %685 = vmatpush.msra.mxu0 0.0
        %686 = vmatpush.msra.mxu0 0.0
        %687 = vmatpush.msra.mxu0 0.0
        %688 = vmatpush.msra.mxu0 0.0
        %689 = vmatpush.msra.mxu0 0.0
        %690 = vmatpush.msra.mxu0 0.0
        %691 = vmatpush.msra.mxu0 0.0
        %692 = vmatpush.msra.mxu0 0.0
        %693 = vmatpush.msra.mxu0 0.0
        %694 = vmatpush.msra.mxu0 %v672
        %695 = vmatmul.f32.gmra.mxu0 %v677
        %v696 = vpop.f32.mrf.mxu0
        %v697 = vadd.f32 0.0, %v696
        %698 = vdwg.mxu0
        %699 = vmatpush.msra.mxu0 0.0
        %700 = vmatpush.msra.mxu0 0.0
        %701 = vmatpush.msra.mxu0 0.0
        %702 = vmatpush.msra.mxu0 0.0
        %703 = vmatpush.msra.mxu0 0.0
        %704 = vmatpush.msra.mxu0 0.0
        %705 = vmatpush.msra.mxu0 0.0
        %706 = vmatpush.msra.mxu0 0.0
        %707 = vmatpush.msra.mxu0 0.0
        %708 = vmatpush.msra.mxu0 0.0
        %709 = vmatpush.msra.mxu0 0.0
        %710 = vmatpush.msra.mxu0 0.0
        %711 = vmatpush.msra.mxu0 0.0
        %712 = vmatpush.msra.mxu0 0.0
        %713 = vmatpush.msra.mxu0 0.0
        %714 = vmatpush.msra.mxu0 %v673
        %715 = vmatmul.f32.gmra.mxu0 %v677
        %v716 = vpop.f32.mrf.mxu0
        %v717 = vadd.f32 0.0, %v716
        %718 = vdwg.mxu0
        %719 = vmatpush.msra.mxu0 0.0
        %720 = vmatpush.msra.mxu0 0.0
        %721 = vmatpush.msra.mxu0 0.0
        %722 = vmatpush.msra.mxu0 0.0
        %723 = vmatpush.msra.mxu0 0.0
        %724 = vmatpush.msra.mxu0 0.0
        %725 = vmatpush.msra.mxu0 0.0
        %726 = vmatpush.msra.mxu0 0.0
        %727 = vmatpush.msra.mxu0 0.0
        %728 = vmatpush.msra.mxu0 0.0
        %729 = vmatpush.msra.mxu0 0.0
        %730 = vmatpush.msra.mxu0 0.0
        %731 = vmatpush.msra.mxu0 0.0
        %732 = vmatpush.msra.mxu0 0.0
        %733 = vmatpush.msra.mxu0 0.0
        %734 = vmatpush.msra.mxu0 %v674
        %735 = vmatmul.f32.gmra.mxu0 %v677
        %v736 = vpop.f32.mrf.mxu0
        %v737 = vadd.f32 0.0, %v736
        %738 = vdwg.mxu0
        %739 = vmatpush.msra.mxu0 0.0
        %740 = vmatpush.msra.mxu0 0.0
        %741 = vmatpush.msra.mxu0 0.0
        %742 = vmatpush.msra.mxu0 0.0
        %743 = vmatpush.msra.mxu0 0.0
        %744 = vmatpush.msra.mxu0 0.0
        %745 = vmatpush.msra.mxu0 0.0
        %746 = vmatpush.msra.mxu0 0.0
        %747 = vmatpush.msra.mxu0 0.0
        %748 = vmatpush.msra.mxu0 0.0
        %749 = vmatpush.msra.mxu0 0.0
        %750 = vmatpush.msra.mxu0 0.0
        %751 = vmatpush.msra.mxu0 0.0
        %752 = vmatpush.msra.mxu0 0.0
        %753 = vmatpush.msra.mxu0 0.0
        %754 = vmatpush.msra.mxu0 %v675
        %755 = vmatmul.f32.gmra.mxu0 %v677
        %v756 = vpop.f32.mrf.mxu0
        %v757 = vadd.f32 0.0, %v756
        %758 = vdwg.mxu0
        %v760 = vsel %vm501, %v523, 0
        %v763 = vsel %vm501, %v610, 0
        %765 = vmatpush.xpose.msra.mxu0 0.0
        %766 = vmatpush.xpose.msra.mxu0 0.0
        %767 = vmatpush.xpose.msra.mxu0 0.0
        %768 = vmatpush.xpose.msra.mxu0 0.0
        %769 = vmatpush.xpose.msra.mxu0 0.0
        %770 = vmatpush.xpose.msra.mxu0 0.0
        %771 = vmatpush.xpose.msra.mxu0 0.0
        %772 = vmatpush.xpose.msra.mxu0 0.0
        %773 = vmatpush.xpose.msra.mxu0 0.0
        %774 = vmatpush.xpose.msra.mxu0 0.0
        %775 = vmatpush.xpose.msra.mxu0 0.0
        %776 = vmatpush.xpose.msra.mxu0 0.0
        %777 = vmatpush.xpose.msra.mxu0 0.0
        %778 = vmatpush.xpose.msra.mxu0 0.0
        %779 = vmatpush.xpose.msra.mxu0 0.0
        %780 = vmatpush.xpose.msra.mxu0 %v763
        %781 = vmatmul.f32.gmra.mxu0 %v760
        %v782 = vpop.f32.mrf.mxu0
        %v783 = vadd.f32 0.0, %v782
        %784 = vdwg.mxu0
        %v786 = vsel %vm501, %v543, 0
        %v789 = vsel %vm501, %v630, 0
        %791 = vmatpush.xpose.msra.mxu0 0.0
        %792 = vmatpush.xpose.msra.mxu0 0.0
        %793 = vmatpush.xpose.msra.mxu0 0.0
        %794 = vmatpush.xpose.msra.mxu0 0.0
        %795 = vmatpush.xpose.msra.mxu0 0.0
        %796 = vmatpush.xpose.msra.mxu0 0.0
        %797 = vmatpush.xpose.msra.mxu0 0.0
        %798 = vmatpush.xpose.msra.mxu0 0.0
        %799 = vmatpush.xpose.msra.mxu0 0.0
        %800 = vmatpush.xpose.msra.mxu0 0.0
        %801 = vmatpush.xpose.msra.mxu0 0.0
        %802 = vmatpush.xpose.msra.mxu0 0.0
        %803 = vmatpush.xpose.msra.mxu0 0.0
        %804 = vmatpush.xpose.msra.mxu0 0.0
        %805 = vmatpush.xpose.msra.mxu0 0.0
        %806 = vmatpush.xpose.msra.mxu0 %v789
        %807 = vmatmul.f32.gmra.mxu0 %v786
        %v808 = vpop.f32.mrf.mxu0
        %v809 = vadd.f32 0.0, %v808
        %810 = vdwg.mxu0
        %v812 = vsel %vm501, %v563, 0
        %v815 = vsel %vm501, %v650, 0
        %817 = vmatpush.xpose.msra.mxu0 0.0
        %818 = vmatpush.xpose.msra.mxu0 0.0
        %819 = vmatpush.xpose.msra.mxu0 0.0
        %820 = vmatpush.xpose.msra.mxu0 0.0
        %821 = vmatpush.xpose.msra.mxu0 0.0
        %822 = vmatpush.xpose.msra.mxu0 0.0
        %823 = vmatpush.xpose.msra.mxu0 0.0
        %824 = vmatpush.xpose.msra.mxu0 0.0
        %825 = vmatpush.xpose.msra.mxu0 0.0
        %826 = vmatpush.xpose.msra.mxu0 0.0
        %827 = vmatpush.xpose.msra.mxu0 0.0
        %828 = vmatpush.xpose.msra.mxu0 0.0
        %829 = vmatpush.xpose.msra.mxu0 0.0
        %830 = vmatpush.xpose.msra.mxu0 0.0
        %831 = vmatpush.xpose.msra.mxu0 0.0
        %832 = vmatpush.xpose.msra.mxu0 %v815
        %833 = vmatmul.f32.gmra.mxu0 %v812
        %v834 = vpop.f32.mrf.mxu0
        %v835 = vadd.f32 0.0, %v834
        %836 = vdwg.mxu0
        %v838 = vsel %vm501, %v583, 0
        %v841 = vsel %vm501, %v670, 0
        %843 = vmatpush.xpose.msra.mxu0 0.0
        %844 = vmatpush.xpose.msra.mxu0 0.0
        %845 = vmatpush.xpose.msra.mxu0 0.0
        %846 = vmatpush.xpose.msra.mxu0 0.0
        %847 = vmatpush.xpose.msra.mxu0 0.0
        %848 = vmatpush.xpose.msra.mxu0 0.0
        %849 = vmatpush.xpose.msra.mxu0 0.0
        %850 = vmatpush.xpose.msra.mxu0 0.0
        %851 = vmatpush.xpose.msra.mxu0 0.0
        %852 = vmatpush.xpose.msra.mxu0 0.0
        %853 = vmatpush.xpose.msra.mxu0 0.0
        %854 = vmatpush.xpose.msra.mxu0 0.0
        %855 = vmatpush.xpose.msra.mxu0 0.0
        %856 = vmatpush.xpose.msra.mxu0 0.0
        %857 = vmatpush.xpose.msra.mxu0 0.0
        %858 = vmatpush.xpose.msra.mxu0 %v841
        %859 = vmatmul.f32.gmra.mxu0 %v838
        %v860 = vpop.f32.mrf.mxu0
        %v861 = vadd.f32 0.0, %v860
        %862 = vdwg.mxu0
        %v863 = vsel %vm501, %v783, -inf
        %864 = vmax.xlane.f32.xlu0 %v863
        %v865 = vpop.xlane.xlu0 %864
        %v866 = vsel %vm501, %v809, -inf
        %867 = vmax.xlane.f32.xlu0 %v866
        %v868 = vpop.xlane.xlu0 %867
        %v869 = vsel %vm501, %v835, -inf
        %870 = vmax.xlane.f32.xlu0 %v869
        %v871 = vpop.xlane.xlu0 %870
        %v872 = vsel %vm501, %v861, -inf
        %873 = vmax.xlane.f32.xlu0 %v872
        %v874 = vpop.xlane.xlu0 %873
        %v875 = vsub.f32 %v783, %v865
        %v876 = vsub.f32 %v809, %v868
        %v877 = vsub.f32 %v835, %v871
        %v878 = vsub.f32 %v861, %v874
        %v879 = vmul.f32 %v875, 1.442695
        %v880 = vpow.pop %v879
        %v881 = vmul.f32 %v876, 1.442695
        %v882 = vpow.pop %v881
        %v883 = vmul.f32 %v877, 1.442695
        %v884 = vpow.pop %v883
        %v885 = vmul.f32 %v878, 1.442695
        %v886 = vpow.pop %v885
        %v887 = vsel %vm501, %v880, 0.0
        %888 = vadd.xlane.f32.xlu0 %v887
        %v889 = vpop.xlane.xlu0 %888
        %v890 = vsel %vm501, %v882, 0.0
        %891 = vadd.xlane.f32.xlu0 %v890
        %v892 = vpop.xlane.xlu0 %891
        %v893 = vsel %vm501, %v884, 0.0
        %894 = vadd.xlane.f32.xlu0 %v893
        %v895 = vpop.xlane.xlu0 %894
        %v896 = vsel %vm501, %v886, 0.0
        %897 = vadd.xlane.f32.xlu0 %v896
        %v898 = vpop.xlane.xlu0 %897
        %v899 = vrcp.pop %v889
        %v900 = vmul.f32 %v889, %v899
        %v901 = vsub.f32 1.0, %v900
        %v902 = vmul.f32 %v899, %v901
        %v903 = vadd.f32 %v899, %v902
        %vm904 = vweird.f32 %v889
        %vm905 = vweird.f32 %v899
        %vm906 = vmor %vm904, %vm905
        %v907 = vsel %vm906, %v899, %v903
        %v908 = vand.u32 2147483647, %v889
        %vm909 = vcmp.eq.f32.partialorder %v908, 8.507059e+37
        %v910 = vand.u32 %v889, 2147483648
        %v911 = vor.u32 1.1754944e-38, %v910
        %v912 = vsel %vm909, %v911, %v907
        %v913 = vmul.f32 %v880, %v912
        %v914 = vrcp.pop %v892
        %v915 = vmul.f32 %v892, %v914
        %v916 = vsub.f32 1.0, %v915
        %v917 = vmul.f32 %v914, %v916
        %v918 = vadd.f32 %v914, %v917
        %vm919 = vweird.f32 %v892
        %vm920 = vweird.f32 %v914
        %vm921 = vmor %vm919, %vm920
        %v922 = vsel %vm921, %v914, %v918
        %v923 = vand.u32 2147483647, %v892
        %vm924 = vcmp.eq.f32.partialorder %v923, 8.507059e+37
        %v925 = vand.u32 %v892, 2147483648
        %v926 = vor.u32 1.1754944e-38, %v925
        %v927 = vsel %vm924, %v926, %v922
        %v928 = vmul.f32 %v882, %v927
        %v929 = vrcp.pop %v895
        %v930 = vmul.f32 %v895, %v929
        %v931 = vsub.f32 1.0, %v930
        %v932 = vmul.f32 %v929, %v931
        %v933 = vadd.f32 %v929, %v932
        %vm934 = vweird.f32 %v895
        %vm935 = vweird.f32 %v929
        %vm936 = vmor %vm934, %vm935
        %v937 = vsel %vm936, %v929, %v933
        %v938 = vand.u32 2147483647, %v895
        %vm939 = vcmp.eq.f32.partialorder %v938, 8.507059e+37
        %v940 = vand.u32 %v895, 2147483648
        %v941 = vor.u32 1.1754944e-38, %v940
        %v942 = vsel %vm939, %v941, %v937
        %v943 = vmul.f32 %v884, %v942
        %v944 = vrcp.pop %v898
        %v945 = vmul.f32 %v898, %v944
        %v946 = vsub.f32 1.0, %v945
        %v947 = vmul.f32 %v944, %v946
        %v948 = vadd.f32 %v944, %v947
        %vm949 = vweird.f32 %v898
        %vm950 = vweird.f32 %v944
        %vm951 = vmor %vm949, %vm950
        %v952 = vsel %vm951, %v944, %v948
        %v953 = vand.u32 2147483647, %v898
        %vm954 = vcmp.eq.f32.partialorder %v953, 8.507059e+37
        %v955 = vand.u32 %v898, 2147483648
        %v956 = vor.u32 1.1754944e-38, %v955
        %v957 = vsel %vm954, %v956, %v952
        %v958 = vmul.f32 %v886, %v957
        %959 = vst.msk [vmem:[%s493] sm:$0xff] %vm501, %v913
        %960 = vst.msk [vmem:[%s493 + $0x8] sm:$0xff] %vm501, %v928
        %961 = vst.msk [vmem:[%s493 + $0x10] sm:$0xff] %vm501, %v943
        %962 = vst.msk [vmem:[%s493 + $0x18] sm:$0xff] %vm501, %v958
        %v964 = vsel %vm501, %v913, 0
        %966 = vmatpush.msra.mxu0 0.0
        %967 = vmatpush.msra.mxu0 0.0
        %968 = vmatpush.msra.mxu0 0.0
        %969 = vmatpush.msra.mxu0 0.0
        %970 = vmatpush.msra.mxu0 0.0
        %971 = vmatpush.msra.mxu0 0.0
        %972 = vmatpush.msra.mxu0 0.0
        %973 = vmatpush.msra.mxu0 0.0
        %974 = vmatpush.msra.mxu0 0.0
        %975 = vmatpush.msra.mxu0 0.0
        %976 = vmatpush.msra.mxu0 0.0
        %977 = vmatpush.msra.mxu0 0.0
        %978 = vmatpush.msra.mxu0 0.0
        %979 = vmatpush.msra.mxu0 0.0
        %980 = vmatpush.msra.mxu0 0.0
        %981 = vmatpush.msra.mxu0 %v697
        %982 = vmatmul.f32.gmra.mxu0 %v964
        %v983 = vpop.f32.mrf.mxu0
        %v984 = vadd.f32 0.0, %v983
        %985 = vdwg.mxu0
        %v987 = vsel %vm501, %v928, 0
        %989 = vmatpush.msra.mxu0 0.0
        %990 = vmatpush.msra.mxu0 0.0
        %991 = vmatpush.msra.mxu0 0.0
        %992 = vmatpush.msra.mxu0 0.0
        %993 = vmatpush.msra.mxu0 0.0
        %994 = vmatpush.msra.mxu0 0.0
        %995 = vmatpush.msra.mxu0 0.0
        %996 = vmatpush.msra.mxu0 0.0
        %997 = vmatpush.msra.mxu0 0.0
        %998 = vmatpush.msra.mxu0 0.0
        %999 = vmatpush.msra.mxu0 0.0
        %1000 = vmatpush.msra.mxu0 0.0
        %1001 = vmatpush.msra.mxu0 0.0
        %1002 = vmatpush.msra.mxu0 0.0
        %1003 = vmatpush.msra.mxu0 0.0
        %1004 = vmatpush.msra.mxu0 %v717
        %1005 = vmatmul.f32.gmra.mxu0 %v987
        %v1006 = vpop.f32.mrf.mxu0
        %v1007 = vadd.f32 0.0, %v1006
        %1008 = vdwg.mxu0
        %v1010 = vsel %vm501, %v943, 0
        %1012 = vmatpush.msra.mxu0 0.0
        %1013 = vmatpush.msra.mxu0 0.0
        %1014 = vmatpush.msra.mxu0 0.0
        %1015 = vmatpush.msra.mxu0 0.0
        %1016 = vmatpush.msra.mxu0 0.0
        %1017 = vmatpush.msra.mxu0 0.0
        %1018 = vmatpush.msra.mxu0 0.0
        %1019 = vmatpush.msra.mxu0 0.0
        %1020 = vmatpush.msra.mxu0 0.0
        %1021 = vmatpush.msra.mxu0 0.0
        %1022 = vmatpush.msra.mxu0 0.0
        %1023 = vmatpush.msra.mxu0 0.0
        %1024 = vmatpush.msra.mxu0 0.0
        %1025 = vmatpush.msra.mxu0 0.0
        %1026 = vmatpush.msra.mxu0 0.0
        %1027 = vmatpush.msra.mxu0 %v737
        %1028 = vmatmul.f32.gmra.mxu0 %v1010
        %v1029 = vpop.f32.mrf.mxu0
        %v1030 = vadd.f32 0.0, %v1029
        %1031 = vdwg.mxu0
        %v1033 = vsel %vm501, %v958, 0
        %1035 = vmatpush.msra.mxu0 0.0
        %1036 = vmatpush.msra.mxu0 0.0
        %1037 = vmatpush.msra.mxu0 0.0
        %1038 = vmatpush.msra.mxu0 0.0
        %1039 = vmatpush.msra.mxu0 0.0
        %1040 = vmatpush.msra.mxu0 0.0
        %1041 = vmatpush.msra.mxu0 0.0
        %1042 = vmatpush.msra.mxu0 0.0
        %1043 = vmatpush.msra.mxu0 0.0
        %1044 = vmatpush.msra.mxu0 0.0
        %1045 = vmatpush.msra.mxu0 0.0
        %1046 = vmatpush.msra.mxu0 0.0
        %1047 = vmatpush.msra.mxu0 0.0
        %1048 = vmatpush.msra.mxu0 0.0
        %1049 = vmatpush.msra.mxu0 0.0
        %1050 = vmatpush.msra.mxu0 %v757
        %1051 = vmatmul.f32.gmra.mxu0 %v1033
        %v1052 = vpop.f32.mrf.mxu0
        %v1053 = vadd.f32 0.0, %v1052
        %1054 = vdwg.mxu0
        %v1055 = vld [vmem:[#allocation13] sm:$0xff]
        %v1056 = vld [vmem:[#allocation13 + $0x8] sm:$0xff]
        %v1057 = vld [vmem:[#allocation13 + $0x10] sm:$0xff]
        %v1058 = vld [vmem:[#allocation13 + $0x18] sm:$0xff]
        %v1060 = vsel %vm501, %v984, 0
        %1062 = vmatpush.msra.mxu0 0.0
        %1063 = vmatpush.msra.mxu0 0.0
        %1064 = vmatpush.msra.mxu0 0.0
        %1065 = vmatpush.msra.mxu0 0.0
        %1066 = vmatpush.msra.mxu0 0.0
        %1067 = vmatpush.msra.mxu0 0.0
        %1068 = vmatpush.msra.mxu0 0.0
        %1069 = vmatpush.msra.mxu0 0.0
        %1070 = vmatpush.msra.mxu0 0.0
        %1071 = vmatpush.msra.mxu0 0.0
        %1072 = vmatpush.msra.mxu0 0.0
        %1073 = vmatpush.msra.mxu0 0.0
        %1074 = vmatpush.msra.mxu0 0.0
        %1075 = vmatpush.msra.mxu0 0.0
        %1076 = vmatpush.msra.mxu0 0.0
        %1077 = vmatpush.msra.mxu0 %v1055
        %1078 = vmatmul.f32.gmra.mxu0 %v1060
        %v1079 = vpop.f32.mrf.mxu0
        %v1080 = vadd.f32 0.0, %v1079
        %1081 = vdwg.mxu0
        %v1083 = vsel %vm501, %v1007, 0
        %1085 = vmatpush.msra.mxu0 0.0
        %1086 = vmatpush.msra.mxu0 0.0
        %1087 = vmatpush.msra.mxu0 0.0
        %1088 = vmatpush.msra.mxu0 0.0
        %1089 = vmatpush.msra.mxu0 0.0
        %1090 = vmatpush.msra.mxu0 0.0
        %1091 = vmatpush.msra.mxu0 0.0
        %1092 = vmatpush.msra.mxu0 0.0
        %1093 = vmatpush.msra.mxu0 0.0
        %1094 = vmatpush.msra.mxu0 0.0
        %1095 = vmatpush.msra.mxu0 0.0
        %1096 = vmatpush.msra.mxu0 0.0
        %1097 = vmatpush.msra.mxu0 0.0
        %1098 = vmatpush.msra.mxu0 0.0
        %1099 = vmatpush.msra.mxu0 0.0
        %1100 = vmatpush.msra.mxu0 %v1056
        %1101 = vmatmul.f32.gmra.mxu0 %v1083
        %v1102 = vpop.f32.mrf.mxu0
        %v1103 = vadd.f32 0.0, %v1102
        %1104 = vdwg.mxu0
        %v1106 = vsel %vm501, %v1030, 0
        %1108 = vmatpush.msra.mxu0 0.0
        %1109 = vmatpush.msra.mxu0 0.0
        %1110 = vmatpush.msra.mxu0 0.0
        %1111 = vmatpush.msra.mxu0 0.0
        %1112 = vmatpush.msra.mxu0 0.0
        %1113 = vmatpush.msra.mxu0 0.0
        %1114 = vmatpush.msra.mxu0 0.0
        %1115 = vmatpush.msra.mxu0 0.0
        %1116 = vmatpush.msra.mxu0 0.0
        %1117 = vmatpush.msra.mxu0 0.0
        %1118 = vmatpush.msra.mxu0 0.0
        %1119 = vmatpush.msra.mxu0 0.0
        %1120 = vmatpush.msra.mxu0 0.0
        %1121 = vmatpush.msra.mxu0 0.0
        %1122 = vmatpush.msra.mxu0 0.0
        %1123 = vmatpush.msra.mxu0 %v1057
        %1124 = vmatmul.f32.gmra.mxu0 %v1106
        %v1125 = vpop.f32.mrf.mxu0
        %v1126 = vadd.f32 0.0, %v1125
        %1127 = vdwg.mxu0
        %v1129 = vsel %vm501, %v1053, 0
        %1131 = vmatpush.msra.mxu0 0.0
        %1132 = vmatpush.msra.mxu0 0.0
        %1133 = vmatpush.msra.mxu0 0.0
        %1134 = vmatpush.msra.mxu0 0.0
        %1135 = vmatpush.msra.mxu0 0.0
        %1136 = vmatpush.msra.mxu0 0.0
        %1137 = vmatpush.msra.mxu0 0.0
        %1138 = vmatpush.msra.mxu0 0.0
        %1139 = vmatpush.msra.mxu0 0.0
        %1140 = vmatpush.msra.mxu0 0.0
        %1141 = vmatpush.msra.mxu0 0.0
        %1142 = vmatpush.msra.mxu0 0.0
        %1143 = vmatpush.msra.mxu0 0.0
        %1144 = vmatpush.msra.mxu0 0.0
        %1145 = vmatpush.msra.mxu0 0.0
        %1146 = vmatpush.msra.mxu0 %v1058
        %1147 = vmatmul.f32.gmra.mxu0 %v1129
        %v1148 = vpop.f32.mrf.mxu0
        %v1149 = vadd.f32 0.0, %v1148
        %1150 = vdwg.mxu0
        %v1151 = vsel %vm501, %v1080, 0.0
        %v1152 = vsel %vm501, %v1103, 0.0
        %v1153 = vadd.f32 %v1151, %v1152
        %v1154 = vsel %vm501, %v1126, 0.0
        %v1155 = vadd.f32 %v1153, %v1154
        %v1156 = vsel %vm501, %v1149, 0.0
        %v1157 = vadd.f32 %v1155, %v1156
        %1158 = vst.msk [vmem:[%s486] sm:$0xff] %vm501, %v1157
        %s1159 = sand.u32 %s220, 1
        %s1160 = scalar_lea.sflag [#allocation4], %s1159
        %s1161 = sand.u32 %s220, 1
        %s1162 = smul.addr %s1161, 8
        %s1163 = scalar_lea.vmem [#allocation14], %s1162
        %s1164 = sand.u32 %s248, 1
        %s1165 = scalar_lea.sflag [#allocation16], %s1164
        %s1166 = sand.u32 %s248, 1
        %s1167 = smul.addr %s1166, 32
        %s1168 = scalar_lea.vmem [#allocation15], %s1167
        // Predicated region
        $region77: #{tpu_custom_call.1} parent=47 // pred_check
          %p1169 = pneg %p230
        $region78: #{tpu_custom_call.1} parent=47 // pred_check_branch
          %1171 = sbr.rel (%p1169) target = $region80
        $region79: #{tpu_custom_call.1} parent=47 // pred_region
          %1173 = vsyncadd %s1160, 0
          %s1174 = sadd.s32 %s39, %s38
          %s1175 = smul.addr %s1174, 8
          %s1176 = scalar_lea.hbm %s7, %s1175
          %s1178 = sshll.u32 %s1163, 4
          %s1179 = int_to_ptr.vmem [resolvable:$true] %s1178
          %s1180 = sshll.u32 %s1176, 4
          %s1181 = int_to_ptr.hbm [resolvable:$true] %s1180
          %1183 = dma.vmem_to_hbm [thread:$0]  %s1179, 128, %s1181, %s1160
        $region80: #{tpu_custom_call.1} parent=47 // pred_fallthru
          _
        // Predicated region
        $region81: #{tpu_custom_call.1} parent=47 // pred_check
          %p1184 = pneg %p258
        $region82: #{tpu_custom_call.1} parent=47 // pred_check_branch
          %1186 = sbr.rel (%p1184) target = $region84
        $region83: #{tpu_custom_call.1} parent=47 // pred_region
          %1188 = vsyncadd %s1165, 0
          %s1189 = smul.addr %s38, 4
          %s1190 = sadd.s32 %s39, %s1189
          %s1191 = smul.addr %s1190, 8
          %s1192 = scalar_lea.hbm %s8, %s1191
          %s1193 = sshll.u32 %s1168, 4
          %s1194 = int_to_ptr.vmem [resolvable:$true] %s1193
          %s1195 = sshll.u32 %s1192, 4
          %s1196 = int_to_ptr.hbm [resolvable:$true] %s1195
          %1201 = dma.vmem_to_hbm [thread:$0]  %s1194, 512, %s1196, %s1165, 128, 128, 8
        $region84: #{tpu_custom_call.1} parent=47 // pred_fallthru
          _
      $region48: #{tpu_custom_call.1} parent=5 // pred_fallthru
        _
      %p1202 = scmp.le.s32.totalorder 2, %s29
      // Predicated region
      $region85: #{tpu_custom_call.1} parent=5 // pred_check
        %p1203 = pneg %p1202
      $region86: #{tpu_custom_call.1} parent=5 // pred_check_branch
        %1205 = sbr.rel (%p1203) target = $region88
      $region87: #{tpu_custom_call.1} parent=5 // pred_region
        %s1206 = ssub.s32 %s29, 2
        // Predicated region
        $region89: #{tpu_custom_call.1} parent=87 // pred_check
          %p1207 = pneg %p236
        $region90: #{tpu_custom_call.1} parent=87 // pred_check_branch
          %1209 = sbr.rel (%p1207) target = $region92
        $region91: #{tpu_custom_call.1} parent=87 // pred_region
          %s1210 = sand.u32 %s221, 1
          %s1211 = scalar_lea.sflag [#allocation4], %s1210
          %s1212 = sand.u32 %s221, 1
          %s1213 = smul.addr %s1212, 8
          %s1214 = scalar_lea.vmem [#allocation14], %s1213
          %1216 = dma.done %s1211, 128
        $region92: #{tpu_custom_call.1} parent=87 // pred_fallthru
          _
        // Predicated region
        $region93: #{tpu_custom_call.1} parent=87 // pred_check
          %p1217 = pneg %p264
        $region94: #{tpu_custom_call.1} parent=87 // pred_check_branch
          %1219 = sbr.rel (%p1217) target = $region96
        $region95: #{tpu_custom_call.1} parent=87 // pred_region
          %s1220 = sand.u32 %s249, 1
          %s1221 = scalar_lea.sflag [#allocation16], %s1220
          %s1222 = sand.u32 %s249, 1
          %s1223 = smul.addr %s1222, 32
          %s1224 = scalar_lea.vmem [#allocation15], %s1223
          %1226 = dma.done %s1221, 512
        $region96: #{tpu_custom_call.1} parent=87 // pred_fallthru
          _
      $region88: #{tpu_custom_call.1} parent=5 // pred_fallthru
        _
    $region6: #{tpu_custom_call.1} parent=1 // loop_footer
      %s33 = sadd.s32 1, %s29
    $region7: #{tpu_custom_call.1} parent=1 // loop_footer_branch
      %28 = sbr.rel target = $region3
    $region8: #{tpu_custom_call.1} parent=1 // loop_exit
      _
    %1227 = vsyncpa [#allocation3], 1
    %s1228 = scalar_lea.sflag [#allocation3], 1
    %1229 = vsyncpa %s1228, 1
    %1230 = vsyncpa [#allocation6], 1
    %s1231 = scalar_lea.sflag [#allocation6], 1
    %1232 = vsyncpa %s1231, 1
    %1233 = vsyncpa [#allocation9], 1
    %1234 = vsyncpa [#allocation12], 1
    %1235 = vsyncpa [#allocation4], 1
    %s1236 = scalar_lea.sflag [#allocation4], 1
    %1237 = vsyncpa %s1236, 1
    %1238 = vsyncpa [#allocation16], 1
    %s1239 = scalar_lea.sflag [#allocation16], 1
    %1240 = vsyncpa %s1239, 1

</llo_original>
